<compile_context>
chip_gen: v6e
topology: v6e:2x2x1
jax: 0.10.0
libtpu: 0.0.40
codegen_flags: <defaults>
</compile_context>

<pallas_src>
import functools

import jax
import jax.numpy as jnp
from jax.experimental import pallas as pl
from jax.experimental.pallas import tpu as pltpu


# ----------------------------------------------------------------------------
# Pallas kernel: fused encoder + decoder, single step, merged (x1, x2) batch.
#   z = relu(x @ Ew1 + eb1) @ Ew2 + eb2
#   r = relu(z @ Dw1 + db1) @ Dw2 + db2
# Weights bf16, accumulation + elementwise f32.
# ----------------------------------------------------------------------------
def _lssl_fused_kernel(x1_ref, x2_ref, ew1_ref, ew2_ref, dw1_ref, dw2_ref,
                       bias_ref, z_ref, r_ref, xbuf_ref):
    b = x1_ref.shape[0]
    hidden = ew1_ref.shape[1]
    len_z = ew2_ref.shape[1]
    d_in = dw2_ref.shape[1]

    # Pack the (x1, x2) pair into one (2B, D_in) activation matrix in VMEM
    # (no HBM stack/concat in the wrapper, single M=2B matmul chain here).
    xbuf_ref[0:b, :] = x1_ref[...]
    xbuf_ref[b:2 * b, :] = x2_ref[...]
    x = xbuf_ref[...].astype(jnp.bfloat16)

    # Concatenated biases, sliced at lane-aligned (multiple-of-128) offsets.
    eb1 = bias_ref[:, 0:hidden]
    eb2 = bias_ref[:, hidden:hidden + len_z]
    db1 = bias_ref[:, hidden + len_z:2 * hidden + len_z]
    db2 = bias_ref[:, 2 * hidden + len_z:2 * hidden + len_z + d_in]

    # Encoder
    h = jnp.dot(x, ew1_ref[...], preferred_element_type=jnp.float32) + eb1
    h = jnp.maximum(h, 0.0)
    z = jnp.dot(h.astype(jnp.bfloat16), ew2_ref[...],
                preferred_element_type=jnp.float32) + eb2
    z_ref[...] = z.astype(z_ref.dtype)

    # Decoder consumes z straight from vregs (no HBM round-trip).
    g = jnp.dot(z.astype(jnp.bfloat16), dw1_ref[...],
                preferred_element_type=jnp.float32) + db1
    g = jnp.maximum(g, 0.0)
    r = jnp.dot(g.astype(jnp.bfloat16), dw2_ref[...],
                preferred_element_type=jnp.float32) + db2
    r_ref[...] = r.astype(r_ref.dtype)


def lssl_fused(x1_flat, x2_flat, params):
    """x1_flat, x2_flat: (B, D_in) f32 -> (z: (2B, len_z), r: (2B, D_in)) f32."""
    b, d_in = x1_flat.shape
    ew1, ew2, dw1, dw2, biases = (params["ew1"], params["ew2"],
                                  params["dw1"], params["dw2"],
                                  params["biases"])
    hidden = ew1.shape[1]
    len_z = ew2.shape[1]
    m = 2 * b

    flops = 2 * m * (d_in * hidden + hidden * len_z
                     + len_z * hidden + hidden * d_in)
    bytes_accessed = (
        (ew1.size + ew2.size + dw1.size + dw2.size) * 2   # bf16 weights
        + biases.size * 4                                  # f32 biases
        + (x1_flat.size + x2_flat.size) * 4                # f32 inputs
        + m * len_z * 4 + m * d_in * 4                     # f32 outputs
    )

    # Single grid step (no grid): every array is DMA'd into VMEM exactly once
    # (~1.2 MB total, far under any chip's scoped VMEM budget), no pipeline
    # per-step overhead, no double-buffering of never-changing weights.
    z, r = pl.pallas_call(
        _lssl_fused_kernel,
        out_shape=(
            jax.ShapeDtypeStruct((m, len_z), jnp.float32),
            jax.ShapeDtypeStruct((m, d_in), jnp.float32),
        ),
        scratch_shapes=[pltpu.VMEM((m, d_in), jnp.float32)],
        cost_estimate=pl.CostEstimate(
            flops=flops, transcendentals=0, bytes_accessed=bytes_accessed),
    )(x1_flat, x2_flat, ew1, ew2, dw1, dw2, biases)
    return z, r


# ----------------------------------------------------------------------------
# Deterministic parameter initialization (synthetic, no checkpoint loading)
# ----------------------------------------------------------------------------
def _linear_init(key, fan_in, fan_out):
    # Mimics nn.Linear's default U(-1/sqrt(fan_in), 1/sqrt(fan_in)) init.
    kw, kb = jax.random.split(key)
    bound = 1.0 / jnp.sqrt(jnp.float32(fan_in))
    w = jax.random.uniform(kw, (fan_in, fan_out), jnp.float32, -bound, bound)
    bvec = jax.random.uniform(kb, (fan_out,), jnp.float32, -bound, bound)
    # Weights in bf16 (MXU-native input, halves HBM traffic); biases stay f32.
    return w.astype(jnp.bfloat16), bvec


def init_lssl_params(key, in_dim, hidden, len_z):
    k_e1, k_e2, k_d1, k_d2, k_tau = jax.random.split(key, 5)
    ew1, eb1 = _linear_init(k_e1, in_dim, hidden)
    ew2, eb2 = _linear_init(k_e2, hidden, len_z)
    dw1, db1 = _linear_init(k_d1, len_z, hidden)
    dw2, db2 = _linear_init(k_d2, hidden, in_dim)
    # Single concatenated bias vector -> one DMA instead of four tiny ones.
    biases = jnp.concatenate([eb1, eb2, db1, db2])[None, :]
    # Tau parameter: randn(1, len_z) normalized to unit norm (unused in the
    # forward pass, matching the reference module).
    tau = jax.random.normal(k_tau, (1, len_z), jnp.float32)
    tau = tau / (jnp.linalg.norm(tau) + 1e-10)
    return {"ew1": ew1, "ew2": ew2, "dw1": dw1, "dw2": dw2,
            "biases": biases, "tau": tau}


# ----------------------------------------------------------------------------
# LSSLNet forward:  (x1, x2) -> (z1, z2, r1, r2)
# ----------------------------------------------------------------------------
def lssl_net_forward(params, x1, x2):
    # TODO(synk): Encoder/Decoder bodies are not defined in the reference
    # snippet; implemented here as deterministic 2-layer MLPs.
    b, c, h, w = x1.shape
    d_in = c * h * w
    z, r = lssl_fused(x1.reshape(b, d_in), x2.reshape(b, d_in), params)
    z1, z2 = z[:b], z[b:]
    r1 = r[:b].reshape(b, c, h, w)
    r2 = r[b:].reshape(b, c, h, w)
    return z1, z2, r1, r2


# ----------------------------------------------------------------------------
# Pure-JAX f32 reference (same bf16 weight rounding / activation casts) for a
# tolerance check against the kernel.
# ----------------------------------------------------------------------------
def _reference_forward(params, x1, x2):
    b, c, h, w = x1.shape
    d_in = c * h * w
    ew1 = params["ew1"].astype(jnp.float32)
    ew2 = params["ew2"].astype(jnp.float32)
    dw1 = params["dw1"].astype(jnp.float32)
    dw2 = params["dw2"].astype(jnp.float32)
    hidden, len_z = ew1.shape[1], ew2.shape[1]
    biases = params["biases"][0]
    eb1 = biases[0:hidden]
    eb2 = biases[hidden:hidden + len_z]
    db1 = biases[hidden + len_z:2 * hidden + len_z]
    db2 = biases[2 * hidden + len_z:2 * hidden + len_z + d_in]
    hp = jax.lax.Precision.HIGHEST

    def bf(v):
        return v.astype(jnp.bfloat16).astype(jnp.float32)

    def encoder(x):
        hh = jnp.maximum(jnp.dot(bf(x), ew1, precision=hp) + eb1, 0.0)
        return jnp.dot(bf(hh), ew2, precision=hp) + eb2

    def decoder(z):
        gg = jnp.maximum(jnp.dot(bf(z), dw1, precision=hp) + db1, 0.0)
        return jnp.dot(bf(gg), dw2, precision=hp) + db2

    z1 = encoder(x1.reshape(b, d_in))
    z2 = encoder(x2.reshape(b, d_in))
    r1 = decoder(z1).reshape(b, c, h, w)
    r2 = decoder(z2).reshape(b, c, h, w)
    return z1, z2, r1, r2


if __name__ == "__main__":
    # Small shapes consistent with the module's forward (image pairs -> latents).
    B, C, H, W = 2, 4, 16, 16
    LEN_Z = 128
    HIDDEN = 256
    IN_DIM = C * H * W  # 1024

    key = jax.random.PRNGKey(0)
    k_params, k_x1, k_x2 = jax.random.split(key, 3)

    params = init_lssl_params(k_params, IN_DIM, HIDDEN, LEN_Z)
    x1 = jax.random.normal(k_x1, (B, C, H, W), jnp.float32)
    x2 = jax.random.normal(k_x2, (B, C, H, W), jnp.float32)

    fwd = jax.jit(functools.partial(lssl_net_forward, params))
    z1, z2, r1, r2 = fwd(x1, x2)
    jax.block_until_ready((z1, z2, r1, r2))

    assert z1.shape == (B, LEN_Z) and z2.shape == (B, LEN_Z)
    assert r1.shape == (B, C, H, W) and r2.shape == (B, C, H, W)
    assert z1.dtype == jnp.float32 and r1.dtype == jnp.float32
    assert jnp.all(jnp.isfinite(z1)) and jnp.all(jnp.isfinite(r1))

    # Numerical check vs. f32 reference (bf16-weight tolerance).
    rz1, rz2, rr1, rr2 = _reference_forward(params, x1, x2)
    for got, want in ((z1, rz1), (z2, rz2), (r1, rr1), (r2, rr2)):
        assert jnp.allclose(got, want, atol=2e-2, rtol=2e-2)

    print("KERNEL_OK")
</pallas_src>

<mosaic_0001>
module attributes {stable_mosaic.version = 11 : i64} {
  func.func @_lssl_fused_kernel(%arg0: memref<2x1024xf32, #tpu.memory_space<vmem>>, %arg1: memref<2x1024xf32, #tpu.memory_space<vmem>>, %arg2: memref<1024x256xbf16, #tpu.memory_space<vmem>>, %arg3: memref<256x128xbf16, #tpu.memory_space<vmem>>, %arg4: memref<128x256xbf16, #tpu.memory_space<vmem>>, %arg5: memref<256x1024xbf16, #tpu.memory_space<vmem>>, %arg6: memref<1x1664xf32, #tpu.memory_space<vmem>>, %arg7: memref<4x128xf32, #tpu.memory_space<vmem>>, %arg8: memref<4x1024xf32, #tpu.memory_space<vmem>>, %arg9: memref<4x1024xf32, #tpu.memory_space<vmem>>) attributes {dimension_semantics = [], scalar_prefetch = 0 : i64, scratch_operands = 1 : i64, tpu.core_type = #tpu.core_type<tc>} {
    %c0 = arith.constant 0 : index
    %c0_0 = arith.constant 0 : index
    %0 = vector.load %arg0[%c0, %c0_0] : memref<2x1024xf32, #tpu.memory_space<vmem>>, vector<2x1024xf32>
    %c0_1 = arith.constant 0 : index
    %c0_2 = arith.constant 0 : index
    %1 = vector.load %arg9[%c0_1, %c0_2] : memref<4x1024xf32, #tpu.memory_space<vmem>>, vector<2x1024xf32>
    tpu.vector_store %arg9[%c0_1, %c0_2], %0 {strides = array<i32>} : memref<4x1024xf32, #tpu.memory_space<vmem>>, vector<2x1024xf32>,
    %c0_3 = arith.constant 0 : index
    %c0_4 = arith.constant 0 : index
    %2 = vector.load %arg1[%c0_3, %c0_4] : memref<2x1024xf32, #tpu.memory_space<vmem>>, vector<2x1024xf32>
    %c2 = arith.constant 2 : index
    %c0_5 = arith.constant 0 : index
    %3 = vector.load %arg9[%c2, %c0_5] : memref<4x1024xf32, #tpu.memory_space<vmem>>, vector<2x1024xf32>
    tpu.vector_store %arg9[%c2, %c0_5], %2 {strides = array<i32>} : memref<4x1024xf32, #tpu.memory_space<vmem>>, vector<2x1024xf32>,
    %c0_6 = arith.constant 0 : index
    %c0_7 = arith.constant 0 : index
    %4 = vector.load %arg9[%c0_6, %c0_7] : memref<4x1024xf32, #tpu.memory_space<vmem>>, vector<4x1024xf32>
    %5 = arith.truncf %4 : vector<4x1024xf32> to vector<4x1024xbf16>
    %c0_8 = arith.constant 0 : index
    %c0_9 = arith.constant 0 : index
    %6 = vector.load %arg6[%c0_8, %c0_9] : memref<1x1664xf32, #tpu.memory_space<vmem>>, vector<1x256xf32>
    %c0_10 = arith.constant 0 : index
    %c256 = arith.constant 256 : index
    %7 = vector.load %arg6[%c0_10, %c256] : memref<1x1664xf32, #tpu.memory_space<vmem>>, vector<1x128xf32>
    %c0_11 = arith.constant 0 : index
    %c384 = arith.constant 384 : index
    %8 = vector.load %arg6[%c0_11, %c384] : memref<1x1664xf32, #tpu.memory_space<vmem>>, vector<1x256xf32>
    %c0_12 = arith.constant 0 : index
    %c640 = arith.constant 640 : index
    %9 = vector.load %arg6[%c0_12, %c640] : memref<1x1664xf32, #tpu.memory_space<vmem>>, vector<1x1024xf32>
    %c0_13 = arith.constant 0 : index
    %c0_14 = arith.constant 0 : index
    %10 = vector.load %arg2[%c0_13, %c0_14] : memref<1024x256xbf16, #tpu.memory_space<vmem>>, vector<1024x256xbf16>
    %cst = arith.constant dense<0.000000e+00> : vector<4x256xf32>
    %11 = tpu.matmul %5, %10, %cst {dimension_numbers = #tpu.dot_dimension_numbers<[1], [0], [0], [1], [0, 0, 1, 1], [], []>} : vector<4x1024xbf16>, vector<1024x256xbf16>, vector<4x256xf32> -> vector<4x256xf32>
    %12 = vector.broadcast %6 : vector<1x256xf32> to vector<4x256xf32>
    %13 = arith.addf %11, %12 : vector<4x256xf32>
    %cst_15 = arith.constant 0.000000e+00 : f32
    %14 = vector.broadcast %cst_15 : f32 to vector<4x256xf32>
    %15 = arith.maximumf %13, %14 : vector<4x256xf32>
    %16 = arith.truncf %15 : vector<4x256xf32> to vector<4x256xbf16>
    %c0_16 = arith.constant 0 : index
    %c0_17 = arith.constant 0 : index
    %17 = vector.load %arg3[%c0_16, %c0_17] : memref<256x128xbf16, #tpu.memory_space<vmem>>, vector<256x128xbf16>
    %cst_18 = arith.constant dense<0.000000e+00> : vector<4x128xf32>
    %18 = tpu.matmul %16, %17, %cst_18 {dimension_numbers = #tpu.dot_dimension_numbers<[1], [0], [0], [1], [0, 0, 1, 1], [], []>} : vector<4x256xbf16>, vector<256x128xbf16>, vector<4x128xf32> -> vector<4x128xf32>
    %19 = vector.broadcast %7 : vector<1x128xf32> to vector<4x128xf32>
    %20 = arith.addf %18, %19 : vector<4x128xf32>
    %c0_19 = arith.constant 0 : index
    %c0_20 = arith.constant 0 : index
    %21 = vector.load %arg7[%c0_19, %c0_20] : memref<4x128xf32, #tpu.memory_space<vmem>>, vector<4x128xf32>
    tpu.vector_store %arg7[%c0_19, %c0_20], %20 {strides = array<i32>} : memref<4x128xf32, #tpu.memory_space<vmem>>, vector<4x128xf32>,
    %22 = arith.truncf %20 : vector<4x128xf32> to vector<4x128xbf16>
    %c0_21 = arith.constant 0 : index
    %c0_22 = arith.constant 0 : index
    %23 = vector.load %arg4[%c0_21, %c0_22] : memref<128x256xbf16, #tpu.memory_space<vmem>>, vector<128x256xbf16>
    %cst_23 = arith.constant dense<0.000000e+00> : vector<4x256xf32>
    %24 = tpu.matmul %22, %23, %cst_23 {dimension_numbers = #tpu.dot_dimension_numbers<[1], [0], [0], [1], [0, 0, 1, 1], [], []>} : vector<4x128xbf16>, vector<128x256xbf16>, vector<4x256xf32> -> vector<4x256xf32>
    %25 = vector.broadcast %8 : vector<1x256xf32> to vector<4x256xf32>
    %26 = arith.addf %24, %25 : vector<4x256xf32>
    %cst_24 = arith.constant 0.000000e+00 : f32
    %27 = vector.broadcast %cst_24 : f32 to vector<4x256xf32>
    %28 = arith.maximumf %26, %27 : vector<4x256xf32>
    %29 = arith.truncf %28 : vector<4x256xf32> to vector<4x256xbf16>
    %c0_25 = arith.constant 0 : index
    %c0_26 = arith.constant 0 : index
    %30 = vector.load %arg5[%c0_25, %c0_26] : memref<256x1024xbf16, #tpu.memory_space<vmem>>, vector<256x1024xbf16>
    %cst_27 = arith.constant dense<0.000000e+00> : vector<4x1024xf32>
    %31 = tpu.matmul %29, %30, %cst_27 {dimension_numbers = #tpu.dot_dimension_numbers<[1], [0], [0], [1], [0, 0, 1, 1], [], []>} : vector<4x256xbf16>, vector<256x1024xbf16>, vector<4x1024xf32> -> vector<4x1024xf32>
    %32 = vector.broadcast %9 : vector<1x1024xf32> to vector<4x1024xf32>
    %33 = arith.addf %31, %32 : vector<4x1024xf32>
    %c0_28 = arith.constant 0 : index
    %c0_29 = arith.constant 0 : index
    %34 = vector.load %arg8[%c0_28, %c0_29] : memref<4x1024xf32, #tpu.memory_space<vmem>>, vector<4x1024xf32>
    tpu.vector_store %arg8[%c0_28, %c0_29], %33 {strides = array<i32>} : memref<4x1024xf32, #tpu.memory_space<vmem>>, vector<4x1024xf32>,
    return
  }
}

</mosaic_0001>

<llo_original>
// kernel: lssl_net_forward.1
$region0: #{lssl_net_forward.1}
  #allocation0 [shape = 'u32[]', space=smem, size = 0x4, offset = 0x4, fixed_abs, tag = 'smem constant byte address 0x4 - core index']
  #allocation1 [shape = 'u32[144,128]{1,0:T(1,128)}', space=vmem, size = 0x12000, scoped, tag = 'internal scratch']
  #allocation2 [shape = 'f32[4,1024]{1,0:T(4,128)}', space=vmem, size = 0x4000, scoped, tag = 'scratch operand']
  %s0 = inlined_call_operand.vmem [shape: f32[2,1024], index: 0, kind: input, shape index: {}]
  %s1 = inlined_call_operand.vmem [shape: f32[2,1024], index: 1, kind: input, shape index: {}]
  %s2 = inlined_call_operand.hbm [shape: bf16[1024,256], index: 2, kind: input, shape index: {}]
  %s3 = inlined_call_operand.vmem [shape: bf16[256,128], index: 3, kind: input, shape index: {}]
  %s4 = inlined_call_operand.vmem [shape: bf16[128,256], index: 4, kind: input, shape index: {}]
  %s5 = inlined_call_operand.hbm [shape: bf16[256,1024], index: 5, kind: input, shape index: {}]
  %s6 = inlined_call_operand.vmem [shape: f32[1,1664], index: 6, kind: input, shape index: {}]
  %s7 = inlined_call_operand.vmem [shape: f32[4,128], index: 7, kind: output, shape index: {0}]
  %s8 = inlined_call_operand.vmem [shape: f32[4,1024], index: 8, kind: output, shape index: {1}]
  %9 = xla_tuple %s7, %s8
  %s10 = sld [smem:[#allocation0]]
  $region54: #{lssl_net_forward.1} parent=0
    _
  %s12 = ssub.s32 1, %s10
  %s13 = scalar_select 0, %s12, %s10
  $region1: #{lssl_net_forward.1} parent=0
    #allocation3 [shape = 'u8[524288]{0}', space=vmem, size = 0x80000, scoped, tag = 'input window, operand 2, single buffered']
    #allocation4 [shape = 's32[1]{0}', space=sflag, size = 0x4, scoped, tag = 'scoped memory for lssl_net_forward.1']
    #allocation5 [shape = 'u8[524288]{0}', space=vmem, size = 0x80000, scoped, tag = 'input window, operand 5, single buffered']
    #allocation6 [shape = 's32[1]{0}', space=sflag, size = 0x4, scoped, tag = 'scoped memory for lssl_net_forward.1']
    %14 = vsyncpa [#allocation4], 0
    %15 = vsyncpa [#allocation6], 0
    // Predicated region
    $region2: #{lssl_net_forward.1} parent=1 // pred_check
      _
    $region3: #{lssl_net_forward.1} parent=1 // pred_check_branch
      %17 = sbr.rel (0) target = $region5
    $region4: #{lssl_net_forward.1} parent=1 // pred_region
      _
    $region5: #{lssl_net_forward.1} parent=1 // pred_fallthru
      _
    // Predicated region
    $region6: #{lssl_net_forward.1} parent=1 // pred_check
      _
    $region7: #{lssl_net_forward.1} parent=1 // pred_check_branch
      %19 = sbr.rel (0) target = $region9
    $region8: #{lssl_net_forward.1} parent=1 // pred_region
      _
    $region9: #{lssl_net_forward.1} parent=1 // pred_fallthru
      _
    // Predicated region
    $region10: #{lssl_net_forward.1} parent=1 // pred_check
      _
    $region11: #{lssl_net_forward.1} parent=1 // pred_check_branch
      %21 = sbr.rel (0) target = $region13
    $region12: #{lssl_net_forward.1} parent=1 // pred_region
      %s23 = ssub.s32 16384, 16384
      %24 = vsyncadd [#allocation4], %s23
      %s25 = sshll.u32 [#allocation3], 4
      %s26 = int_to_ptr.vmem [resolvable:$true] %s25
      %31 = dma.hbm_to_vmem [thread:$0]  %s2, 16384, %s26, [#allocation4], 128, 128, 8
    $region13: #{lssl_net_forward.1} parent=1 // pred_fallthru
      _
    // Predicated region
    $region14: #{lssl_net_forward.1} parent=1 // pred_check
      _
    $region15: #{lssl_net_forward.1} parent=1 // pred_check_branch
      %33 = sbr.rel (0) target = $region17
    $region16: #{lssl_net_forward.1} parent=1 // pred_region
      _
    $region17: #{lssl_net_forward.1} parent=1 // pred_fallthru
      _
    // Predicated region
    $region18: #{lssl_net_forward.1} parent=1 // pred_check
      _
    $region19: #{lssl_net_forward.1} parent=1 // pred_check_branch
      %35 = sbr.rel (0) target = $region21
    $region20: #{lssl_net_forward.1} parent=1 // pred_region
      _
    $region21: #{lssl_net_forward.1} parent=1 // pred_fallthru
      _
    // Predicated region
    $region22: #{lssl_net_forward.1} parent=1 // pred_check
      _
    $region23: #{lssl_net_forward.1} parent=1 // pred_check_branch
      %37 = sbr.rel (0) target = $region25
    $region24: #{lssl_net_forward.1} parent=1 // pred_region
      %s39 = ssub.s32 16384, 16384
      %40 = vsyncadd [#allocation6], %s39
      %s41 = sshll.u32 [#allocation5], 4
      %s42 = int_to_ptr.vmem [resolvable:$true] %s41
      %47 = dma.hbm_to_vmem [thread:$0]  %s5, 16384, %s42, [#allocation6], 512, 512, 32
    $region25: #{lssl_net_forward.1} parent=1 // pred_fallthru
      _
    // Predicated region
    $region26: #{lssl_net_forward.1} parent=1 // pred_check
      _
    $region27: #{lssl_net_forward.1} parent=1 // pred_check_branch
      %49 = sbr.rel (0) target = $region29
    $region28: #{lssl_net_forward.1} parent=1 // pred_region
      _
    $region29: #{lssl_net_forward.1} parent=1 // pred_fallthru
      _
    // Predicated region
    $region30: #{lssl_net_forward.1} parent=1 // pred_check
      _
    $region31: #{lssl_net_forward.1} parent=1 // pred_check_branch
      %51 = sbr.rel (0) target = $region33
    $region32: #{lssl_net_forward.1} parent=1 // pred_region
      %52 = dma.done [#allocation4], 16384
    $region33: #{lssl_net_forward.1} parent=1 // pred_fallthru
      _
    // Predicated region
    $region34: #{lssl_net_forward.1} parent=1 // pred_check
      _
    $region35: #{lssl_net_forward.1} parent=1 // pred_check_branch
      %54 = sbr.rel (0) target = $region37
    $region36: #{lssl_net_forward.1} parent=1 // pred_region
      %55 = dma.done [#allocation6], 16384
    $region37: #{lssl_net_forward.1} parent=1 // pred_fallthru
      _
    %v57 = vld [vmem:[%s0] sm:$0xff]
    %v58 = vld [vmem:[%s0 + $0x8] sm:$0xff]
    %v61 = vcombine.high %v57, %v57
    %v63 = vunpack.c.l.s4 1983009808
    %v64 = vunpack.c.0.s8 %v63
    %v65 = vlaneseq
    %v66 = vshrl.u32 %v65, 7
    %v67 = vsub.s32 %v64, %v66
    %v68 = vrot.slane %v57, %v67
    %v70 = vunpack.c.l.s4 1983009808
    %v71 = vunpack.c.0.s8 %v70
    %v72 = vlaneseq
    %v73 = vshrl.u32 %v72, 7
    %v74 = vsub.s32 %v71, %v73
    %v75 = vrot.slane %v61, %v74
    %v76 = vcombine.high %v58, %v58
    %v78 = vunpack.c.l.s4 1983009808
    %v79 = vunpack.c.0.s8 %v78
    %v80 = vlaneseq
    %v81 = vshrl.u32 %v80, 7
    %v82 = vsub.s32 %v79, %v81
    %v83 = vrot.slane %v58, %v82
    %v85 = vunpack.c.l.s4 1983009808
    %v86 = vunpack.c.0.s8 %v85
    %v87 = vlaneseq
    %v88 = vshrl.u32 %v87, 7
    %v89 = vsub.s32 %v86, %v88
    %v90 = vrot.slane %v76, %v89
    %95 = vst [vmem:[#allocation2] sm:$0x33] %v68
    %96 = vst [vmem:[#allocation2 + $0x8] sm:$0x33] %v75
    %97 = vst [vmem:[#allocation2 + $0x10] sm:$0x33] %v83
    %98 = vst [vmem:[#allocation2 + $0x18] sm:$0x33] %v90
    %v99 = vld [vmem:[%s1] sm:$0xff]
    %v100 = vld [vmem:[%s1 + $0x8] sm:$0xff]
    %v103 = vcombine.low %v99, %v99
    %v105 = vunpack.c.l.s4 1983009808
    %v106 = vunpack.c.0.s8 %v105
    %v107 = vlaneseq
    %v108 = vshrl.u32 %v107, 7
    %v109 = vsub.s32 %v106, %v108
    %v110 = vrot.slane %v103, %v109
    %v112 = vunpack.c.l.s4 1983009808
    %v113 = vunpack.c.0.s8 %v112
    %v114 = vlaneseq
    %v115 = vshrl.u32 %v114, 7
    %v116 = vsub.s32 %v113, %v115
    %v117 = vrot.slane %v99, %v116
    %v118 = vcombine.low %v100, %v100
    %v120 = vunpack.c.l.s4 1983009808
    %v121 = vunpack.c.0.s8 %v120
    %v122 = vlaneseq
    %v123 = vshrl.u32 %v122, 7
    %v124 = vsub.s32 %v121, %v123
    %v125 = vrot.slane %v118, %v124
    %v127 = vunpack.c.l.s4 1983009808
    %v128 = vunpack.c.0.s8 %v127
    %v129 = vlaneseq
    %v130 = vshrl.u32 %v129, 7
    %v131 = vsub.s32 %v128, %v130
    %v132 = vrot.slane %v100, %v131
    %137 = vst [vmem:[#allocation2] sm:$0xcc] %v110
    %138 = vst [vmem:[#allocation2 + $0x8] sm:$0xcc] %v117
    %139 = vst [vmem:[#allocation2 + $0x10] sm:$0xcc] %v125
    %140 = vst [vmem:[#allocation2 + $0x18] sm:$0xcc] %v132
    %v141 = vld [vmem:[#allocation2] sm:$0xff]
    %v142 = vld [vmem:[#allocation2 + $0x8] sm:$0xff]
    %v143 = vld [vmem:[#allocation2 + $0x10] sm:$0xff]
    %v144 = vld [vmem:[#allocation2 + $0x18] sm:$0xff]
    %v149 = vcombine.high %v141, %v141
    %v150 = vcombine.high %v142, %v142
    %v151 = vcombine.high %v143, %v143
    %v152 = vcombine.high %v144, %v144
    %v157 = vpack.c.bf16 %v141, %v141
    %v158 = vpack.c.bf16 %v149, %v149
    %v159 = vpack.c.bf16 %v142, %v142
    %v160 = vpack.c.bf16 %v150, %v150
    %v161 = vpack.c.bf16 %v143, %v143
    %v162 = vpack.c.bf16 %v151, %v151
    %v163 = vpack.c.bf16 %v144, %v144
    %v164 = vpack.c.bf16 %v152, %v152
    %v165 = vld [vmem:[%s6] sm:$0x3]
    %v166 = vld [vmem:[%s6 + $0x2] sm:$0x1]
    %v167 = vld [vmem:[%s6 + $0x3] sm:$0x3]
    %v168 = vld [vmem:[%s6 + $0x5] sm:$0xff]
    %v169 = vld [vmem:[#allocation3] sm:$0xff]
    %v170 = vld [vmem:[#allocation3 + $0x8] sm:$0xff]
    %v171 = vld [vmem:[#allocation3 + $0x10] sm:$0xff]
    %v172 = vld [vmem:[#allocation3 + $0x18] sm:$0xff]
    %v173 = vld [vmem:[#allocation3 + $0x20] sm:$0xff]
    %v174 = vld [vmem:[#allocation3 + $0x28] sm:$0xff]
    %v175 = vld [vmem:[#allocation3 + $0x30] sm:$0xff]
    %v176 = vld [vmem:[#allocation3 + $0x38] sm:$0xff]
    %v177 = vld [vmem:[#allocation3 + $0x40] sm:$0xff]
    %v178 = vld [vmem:[#allocation3 + $0x48] sm:$0xff]
    %v179 = vld [vmem:[#allocation3 + $0x50] sm:$0xff]
    %v180 = vld [vmem:[#allocation3 + $0x58] sm:$0xff]
    %v181 = vld [vmem:[#allocation3 + $0x60] sm:$0xff]
    %v182 = vld [vmem:[#allocation3 + $0x68] sm:$0xff]
    %v183 = vld [vmem:[#allocation3 + $0x70] sm:$0xff]
    %v184 = vld [vmem:[#allocation3 + $0x78] sm:$0xff]
    %v185 = vld [vmem:[#allocation3 + $0x80] sm:$0xff]
    %v186 = vld [vmem:[#allocation3 + $0x88] sm:$0xff]
    %v187 = vld [vmem:[#allocation3 + $0x90] sm:$0xff]
    %v188 = vld [vmem:[#allocation3 + $0x98] sm:$0xff]
    %v189 = vld [vmem:[#allocation3 + $0xa0] sm:$0xff]
    %v190 = vld [vmem:[#allocation3 + $0xa8] sm:$0xff]
    %v191 = vld [vmem:[#allocation3 + $0xb0] sm:$0xff]
    %v192 = vld [vmem:[#allocation3 + $0xb8] sm:$0xff]
    %v193 = vld [vmem:[#allocation3 + $0xc0] sm:$0xff]
    %v194 = vld [vmem:[#allocation3 + $0xc8] sm:$0xff]
    %v195 = vld [vmem:[#allocation3 + $0xd0] sm:$0xff]
    %v196 = vld [vmem:[#allocation3 + $0xd8] sm:$0xff]
    %v197 = vld [vmem:[#allocation3 + $0xe0] sm:$0xff]
    %v198 = vld [vmem:[#allocation3 + $0xe8] sm:$0xff]
    %v199 = vld [vmem:[#allocation3 + $0xf0] sm:$0xff]
    %v200 = vld [vmem:[#allocation3 + $0xf8] sm:$0xff]
    %v201 = vld [vmem:[#allocation3 + $0x100] sm:$0xff]
    %v202 = vld [vmem:[#allocation3 + $0x108] sm:$0xff]
    %v203 = vld [vmem:[#allocation3 + $0x110] sm:$0xff]
    %v204 = vld [vmem:[#allocation3 + $0x118] sm:$0xff]
    %v205 = vld [vmem:[#allocation3 + $0x120] sm:$0xff]
    %v206 = vld [vmem:[#allocation3 + $0x128] sm:$0xff]
    %v207 = vld [vmem:[#allocation3 + $0x130] sm:$0xff]
    %v208 = vld [vmem:[#allocation3 + $0x138] sm:$0xff]
    %v209 = vld [vmem:[#allocation3 + $0x140] sm:$0xff]
    %v210 = vld [vmem:[#allocation3 + $0x148] sm:$0xff]
    %v211 = vld [vmem:[#allocation3 + $0x150] sm:$0xff]
    %v212 = vld [vmem:[#allocation3 + $0x158] sm:$0xff]
    %v213 = vld [vmem:[#allocation3 + $0x160] sm:$0xff]
    %v214 = vld [vmem:[#allocation3 + $0x168] sm:$0xff]
    %v215 = vld [vmem:[#allocation3 + $0x170] sm:$0xff]
    %v216 = vld [vmem:[#allocation3 + $0x178] sm:$0xff]
    %v217 = vld [vmem:[#allocation3 + $0x180] sm:$0xff]
    %v218 = vld [vmem:[#allocation3 + $0x188] sm:$0xff]
    %v219 = vld [vmem:[#allocation3 + $0x190] sm:$0xff]
    %v220 = vld [vmem:[#allocation3 + $0x198] sm:$0xff]
    %v221 = vld [vmem:[#allocation3 + $0x1a0] sm:$0xff]
    %v222 = vld [vmem:[#allocation3 + $0x1a8] sm:$0xff]
    %v223 = vld [vmem:[#allocation3 + $0x1b0] sm:$0xff]
    %v224 = vld [vmem:[#allocation3 + $0x1b8] sm:$0xff]
    %v225 = vld [vmem:[#allocation3 + $0x1c0] sm:$0xff]
    %v226 = vld [vmem:[#allocation3 + $0x1c8] sm:$0xff]
    %v227 = vld [vmem:[#allocation3 + $0x1d0] sm:$0xff]
    %v228 = vld [vmem:[#allocation3 + $0x1d8] sm:$0xff]
    %v229 = vld [vmem:[#allocation3 + $0x1e0] sm:$0xff]
    %v230 = vld [vmem:[#allocation3 + $0x1e8] sm:$0xff]
    %v231 = vld [vmem:[#allocation3 + $0x1f0] sm:$0xff]
    %v232 = vld [vmem:[#allocation3 + $0x1f8] sm:$0xff]
    %v233 = vld [vmem:[#allocation3 + $0x200] sm:$0xff]
    %v234 = vld [vmem:[#allocation3 + $0x208] sm:$0xff]
    %v235 = vld [vmem:[#allocation3 + $0x210] sm:$0xff]
    %v236 = vld [vmem:[#allocation3 + $0x218] sm:$0xff]
    %v237 = vld [vmem:[#allocation3 + $0x220] sm:$0xff]
    %v238 = vld [vmem:[#allocation3 + $0x228] sm:$0xff]
    %v239 = vld [vmem:[#allocation3 + $0x230] sm:$0xff]
    %v240 = vld [vmem:[#allocation3 + $0x238] sm:$0xff]
    %v241 = vld [vmem:[#allocation3 + $0x240] sm:$0xff]
    %v242 = vld [vmem:[#allocation3 + $0x248] sm:$0xff]
    %v243 = vld [vmem:[#allocation3 + $0x250] sm:$0xff]
    %v244 = vld [vmem:[#allocation3 + $0x258] sm:$0xff]
    %v245 = vld [vmem:[#allocation3 + $0x260] sm:$0xff]
    %v246 = vld [vmem:[#allocation3 + $0x268] sm:$0xff]
    %v247 = vld [vmem:[#allocation3 + $0x270] sm:$0xff]
    %v248 = vld [vmem:[#allocation3 + $0x278] sm:$0xff]
    %v249 = vld [vmem:[#allocation3 + $0x280] sm:$0xff]
    %v250 = vld [vmem:[#allocation3 + $0x288] sm:$0xff]
    %v251 = vld [vmem:[#allocation3 + $0x290] sm:$0xff]
    %v252 = vld [vmem:[#allocation3 + $0x298] sm:$0xff]
    %v253 = vld [vmem:[#allocation3 + $0x2a0] sm:$0xff]
    %v254 = vld [vmem:[#allocation3 + $0x2a8] sm:$0xff]
    %v255 = vld [vmem:[#allocation3 + $0x2b0] sm:$0xff]
    %v256 = vld [vmem:[#allocation3 + $0x2b8] sm:$0xff]
    %v257 = vld [vmem:[#allocation3 + $0x2c0] sm:$0xff]
    %v258 = vld [vmem:[#allocation3 + $0x2c8] sm:$0xff]
    %v259 = vld [vmem:[#allocation3 + $0x2d0] sm:$0xff]
    %v260 = vld [vmem:[#allocation3 + $0x2d8] sm:$0xff]
    %v261 = vld [vmem:[#allocation3 + $0x2e0] sm:$0xff]
    %v262 = vld [vmem:[#allocation3 + $0x2e8] sm:$0xff]
    %v263 = vld [vmem:[#allocation3 + $0x2f0] sm:$0xff]
    %v264 = vld [vmem:[#allocation3 + $0x2f8] sm:$0xff]
    %v265 = vld [vmem:[#allocation3 + $0x300] sm:$0xff]
    %v266 = vld [vmem:[#allocation3 + $0x308] sm:$0xff]
    %v267 = vld [vmem:[#allocation3 + $0x310] sm:$0xff]
    %v268 = vld [vmem:[#allocation3 + $0x318] sm:$0xff]
    %v269 = vld [vmem:[#allocation3 + $0x320] sm:$0xff]
    %v270 = vld [vmem:[#allocation3 + $0x328] sm:$0xff]
    %v271 = vld [vmem:[#allocation3 + $0x330] sm:$0xff]
    %v272 = vld [vmem:[#allocation3 + $0x338] sm:$0xff]
    %v273 = vld [vmem:[#allocation3 + $0x340] sm:$0xff]
    %v274 = vld [vmem:[#allocation3 + $0x348] sm:$0xff]
    %v275 = vld [vmem:[#allocation3 + $0x350] sm:$0xff]
    %v276 = vld [vmem:[#allocation3 + $0x358] sm:$0xff]
    %v277 = vld [vmem:[#allocation3 + $0x360] sm:$0xff]
    %v278 = vld [vmem:[#allocation3 + $0x368] sm:$0xff]
    %v279 = vld [vmem:[#allocation3 + $0x370] sm:$0xff]
    %v280 = vld [vmem:[#allocation3 + $0x378] sm:$0xff]
    %v281 = vld [vmem:[#allocation3 + $0x380] sm:$0xff]
    %v282 = vld [vmem:[#allocation3 + $0x388] sm:$0xff]
    %v283 = vld [vmem:[#allocation3 + $0x390] sm:$0xff]
    %v284 = vld [vmem:[#allocation3 + $0x398] sm:$0xff]
    %v285 = vld [vmem:[#allocation3 + $0x3a0] sm:$0xff]
    %v286 = vld [vmem:[#allocation3 + $0x3a8] sm:$0xff]
    %v287 = vld [vmem:[#allocation3 + $0x3b0] sm:$0xff]
    %v288 = vld [vmem:[#allocation3 + $0x3b8] sm:$0xff]
    %v289 = vld [vmem:[#allocation3 + $0x3c0] sm:$0xff]
    %v290 = vld [vmem:[#allocation3 + $0x3c8] sm:$0xff]
    %v291 = vld [vmem:[#allocation3 + $0x3d0] sm:$0xff]
    %v292 = vld [vmem:[#allocation3 + $0x3d8] sm:$0xff]
    %v293 = vld [vmem:[#allocation3 + $0x3e0] sm:$0xff]
    %v294 = vld [vmem:[#allocation3 + $0x3e8] sm:$0xff]
    %v295 = vld [vmem:[#allocation3 + $0x3f0] sm:$0xff]
    %v296 = vld [vmem:[#allocation3 + $0x3f8] sm:$0xff]
    %v298 = vlaneseq
    %v299 = vshrl.u32 %v298, 7
    %v300 = vsub.s32 0, %v299
    %v301 = vrot.slane %v165, %v300
    %v302 = vlaneseq
    %v303 = vshrl.u32 %v302, 7
    %v304 = vsub.s32 1, %v303
    %v305 = vrot.slane %v165, %v304
    %v436 = vunpack.c.l.b16 %v169
    %v437 = vunpack.c.h.b16 %v169
    %v438 = vunpack.c.l.b16 %v170
    %v439 = vunpack.c.h.b16 %v170
    %v440 = vunpack.c.l.b16 %v171
    %v441 = vunpack.c.h.b16 %v171
    %v442 = vunpack.c.l.b16 %v172
    %v443 = vunpack.c.h.b16 %v172
    %v444 = vunpack.c.l.b16 %v173
    %v445 = vunpack.c.h.b16 %v173
    %v446 = vunpack.c.l.b16 %v174
    %v447 = vunpack.c.h.b16 %v174
    %v448 = vunpack.c.l.b16 %v175
    %v449 = vunpack.c.h.b16 %v175
    %v450 = vunpack.c.l.b16 %v176
    %v451 = vunpack.c.h.b16 %v176
    %v452 = vunpack.c.l.b16 %v177
    %v453 = vunpack.c.h.b16 %v177
    %v454 = vunpack.c.l.b16 %v178
    %v455 = vunpack.c.h.b16 %v178
    %v456 = vunpack.c.l.b16 %v179
    %v457 = vunpack.c.h.b16 %v179
    %v458 = vunpack.c.l.b16 %v180
    %v459 = vunpack.c.h.b16 %v180
    %v460 = vunpack.c.l.b16 %v181
    %v461 = vunpack.c.h.b16 %v181
    %v462 = vunpack.c.l.b16 %v182
    %v463 = vunpack.c.h.b16 %v182
    %v464 = vunpack.c.l.b16 %v183
    %v465 = vunpack.c.h.b16 %v183
    %v466 = vunpack.c.l.b16 %v184
    %v467 = vunpack.c.h.b16 %v184
    %v468 = vunpack.c.l.b16 %v185
    %v469 = vunpack.c.h.b16 %v185
    %v470 = vunpack.c.l.b16 %v186
    %v471 = vunpack.c.h.b16 %v186
    %v472 = vunpack.c.l.b16 %v187
    %v473 = vunpack.c.h.b16 %v187
    %v474 = vunpack.c.l.b16 %v188
    %v475 = vunpack.c.h.b16 %v188
    %v476 = vunpack.c.l.b16 %v189
    %v477 = vunpack.c.h.b16 %v189
    %v478 = vunpack.c.l.b16 %v190
    %v479 = vunpack.c.h.b16 %v190
    %v480 = vunpack.c.l.b16 %v191
    %v481 = vunpack.c.h.b16 %v191
    %v482 = vunpack.c.l.b16 %v192
    %v483 = vunpack.c.h.b16 %v192
    %v484 = vunpack.c.l.b16 %v193
    %v485 = vunpack.c.h.b16 %v193
    %v486 = vunpack.c.l.b16 %v194
    %v487 = vunpack.c.h.b16 %v194
    %v488 = vunpack.c.l.b16 %v195
    %v489 = vunpack.c.h.b16 %v195
    %v490 = vunpack.c.l.b16 %v196
    %v491 = vunpack.c.h.b16 %v196
    %v492 = vunpack.c.l.b16 %v197
    %v493 = vunpack.c.h.b16 %v197
    %v494 = vunpack.c.l.b16 %v198
    %v495 = vunpack.c.h.b16 %v198
    %v496 = vunpack.c.l.b16 %v199
    %v497 = vunpack.c.h.b16 %v199
    %v498 = vunpack.c.l.b16 %v200
    %v499 = vunpack.c.h.b16 %v200
    %v500 = vunpack.c.l.b16 %v201
    %v501 = vunpack.c.h.b16 %v201
    %v502 = vunpack.c.l.b16 %v202
    %v503 = vunpack.c.h.b16 %v202
    %v504 = vunpack.c.l.b16 %v203
    %v505 = vunpack.c.h.b16 %v203
    %v506 = vunpack.c.l.b16 %v204
    %v507 = vunpack.c.h.b16 %v204
    %v508 = vunpack.c.l.b16 %v205
    %v509 = vunpack.c.h.b16 %v205
    %v510 = vunpack.c.l.b16 %v206
    %v511 = vunpack.c.h.b16 %v206
    %v512 = vunpack.c.l.b16 %v207
    %v513 = vunpack.c.h.b16 %v207
    %v514 = vunpack.c.l.b16 %v208
    %v515 = vunpack.c.h.b16 %v208
    %v516 = vunpack.c.l.b16 %v209
    %v517 = vunpack.c.h.b16 %v209
    %v518 = vunpack.c.l.b16 %v210
    %v519 = vunpack.c.h.b16 %v210
    %v520 = vunpack.c.l.b16 %v211
    %v521 = vunpack.c.h.b16 %v211
    %v522 = vunpack.c.l.b16 %v212
    %v523 = vunpack.c.h.b16 %v212
    %v524 = vunpack.c.l.b16 %v213
    %v525 = vunpack.c.h.b16 %v213
    %v526 = vunpack.c.l.b16 %v214
    %v527 = vunpack.c.h.b16 %v214
    %v528 = vunpack.c.l.b16 %v215
    %v529 = vunpack.c.h.b16 %v215
    %v530 = vunpack.c.l.b16 %v216
    %v531 = vunpack.c.h.b16 %v216
    %v532 = vunpack.c.l.b16 %v217
    %v533 = vunpack.c.h.b16 %v217
    %v534 = vunpack.c.l.b16 %v218
    %v535 = vunpack.c.h.b16 %v218
    %v536 = vunpack.c.l.b16 %v219
    %v537 = vunpack.c.h.b16 %v219
    %v538 = vunpack.c.l.b16 %v220
    %v539 = vunpack.c.h.b16 %v220
    %v540 = vunpack.c.l.b16 %v221
    %v541 = vunpack.c.h.b16 %v221
    %v542 = vunpack.c.l.b16 %v222
    %v543 = vunpack.c.h.b16 %v222
    %v544 = vunpack.c.l.b16 %v223
    %v545 = vunpack.c.h.b16 %v223
    %v546 = vunpack.c.l.b16 %v224
    %v547 = vunpack.c.h.b16 %v224
    %v548 = vunpack.c.l.b16 %v225
    %v549 = vunpack.c.h.b16 %v225
    %v550 = vunpack.c.l.b16 %v226
    %v551 = vunpack.c.h.b16 %v226
    %v552 = vunpack.c.l.b16 %v227
    %v553 = vunpack.c.h.b16 %v227
    %v554 = vunpack.c.l.b16 %v228
    %v555 = vunpack.c.h.b16 %v228
    %v556 = vunpack.c.l.b16 %v229
    %v557 = vunpack.c.h.b16 %v229
    %v558 = vunpack.c.l.b16 %v230
    %v559 = vunpack.c.h.b16 %v230
    %v560 = vunpack.c.l.b16 %v231
    %v561 = vunpack.c.h.b16 %v231
    %v562 = vunpack.c.l.b16 %v232
    %v563 = vunpack.c.h.b16 %v232
    %v564 = vunpack.c.l.b16 %v233
    %v565 = vunpack.c.h.b16 %v233
    %v566 = vunpack.c.l.b16 %v234
    %v567 = vunpack.c.h.b16 %v234
    %v568 = vunpack.c.l.b16 %v235
    %v569 = vunpack.c.h.b16 %v235
    %v570 = vunpack.c.l.b16 %v236
    %v571 = vunpack.c.h.b16 %v236
    %v572 = vunpack.c.l.b16 %v237
    %v573 = vunpack.c.h.b16 %v237
    %v574 = vunpack.c.l.b16 %v238
    %v575 = vunpack.c.h.b16 %v238
    %v576 = vunpack.c.l.b16 %v239
    %v577 = vunpack.c.h.b16 %v239
    %v578 = vunpack.c.l.b16 %v240
    %v579 = vunpack.c.h.b16 %v240
    %v580 = vunpack.c.l.b16 %v241
    %v581 = vunpack.c.h.b16 %v241
    %v582 = vunpack.c.l.b16 %v242
    %v583 = vunpack.c.h.b16 %v242
    %v584 = vunpack.c.l.b16 %v243
    %v585 = vunpack.c.h.b16 %v243
    %v586 = vunpack.c.l.b16 %v244
    %v587 = vunpack.c.h.b16 %v244
    %v588 = vunpack.c.l.b16 %v245
    %v589 = vunpack.c.h.b16 %v245
    %v590 = vunpack.c.l.b16 %v246
    %v591 = vunpack.c.h.b16 %v246
    %v592 = vunpack.c.l.b16 %v247
    %v593 = vunpack.c.h.b16 %v247
    %v594 = vunpack.c.l.b16 %v248
    %v595 = vunpack.c.h.b16 %v248
    %v596 = vunpack.c.l.b16 %v249
    %v597 = vunpack.c.h.b16 %v249
    %v598 = vunpack.c.l.b16 %v250
    %v599 = vunpack.c.h.b16 %v250
    %v600 = vunpack.c.l.b16 %v251
    %v601 = vunpack.c.h.b16 %v251
    %v602 = vunpack.c.l.b16 %v252
    %v603 = vunpack.c.h.b16 %v252
    %v604 = vunpack.c.l.b16 %v253
    %v605 = vunpack.c.h.b16 %v253
    %v606 = vunpack.c.l.b16 %v254
    %v607 = vunpack.c.h.b16 %v254
    %v608 = vunpack.c.l.b16 %v255
    %v609 = vunpack.c.h.b16 %v255
    %v610 = vunpack.c.l.b16 %v256
    %v611 = vunpack.c.h.b16 %v256
    %v612 = vunpack.c.l.b16 %v257
    %v613 = vunpack.c.h.b16 %v257
    %v614 = vunpack.c.l.b16 %v258
    %v615 = vunpack.c.h.b16 %v258
    %v616 = vunpack.c.l.b16 %v259
    %v617 = vunpack.c.h.b16 %v259
    %v618 = vunpack.c.l.b16 %v260
    %v619 = vunpack.c.h.b16 %v260
    %v620 = vunpack.c.l.b16 %v261
    %v621 = vunpack.c.h.b16 %v261
    %v622 = vunpack.c.l.b16 %v262
    %v623 = vunpack.c.h.b16 %v262
    %v624 = vunpack.c.l.b16 %v263
    %v625 = vunpack.c.h.b16 %v263
    %v626 = vunpack.c.l.b16 %v264
    %v627 = vunpack.c.h.b16 %v264
    %v628 = vunpack.c.l.b16 %v265
    %v629 = vunpack.c.h.b16 %v265
    %v630 = vunpack.c.l.b16 %v266
    %v631 = vunpack.c.h.b16 %v266
    %v632 = vunpack.c.l.b16 %v267
    %v633 = vunpack.c.h.b16 %v267
    %v634 = vunpack.c.l.b16 %v268
    %v635 = vunpack.c.h.b16 %v268
    %v636 = vunpack.c.l.b16 %v269
    %v637 = vunpack.c.h.b16 %v269
    %v638 = vunpack.c.l.b16 %v270
    %v639 = vunpack.c.h.b16 %v270
    %v640 = vunpack.c.l.b16 %v271
    %v641 = vunpack.c.h.b16 %v271
    %v642 = vunpack.c.l.b16 %v272
    %v643 = vunpack.c.h.b16 %v272
    %v644 = vunpack.c.l.b16 %v273
    %v645 = vunpack.c.h.b16 %v273
    %v646 = vunpack.c.l.b16 %v274
    %v647 = vunpack.c.h.b16 %v274
    %v648 = vunpack.c.l.b16 %v275
    %v649 = vunpack.c.h.b16 %v275
    %v650 = vunpack.c.l.b16 %v276
    %v651 = vunpack.c.h.b16 %v276
    %v652 = vunpack.c.l.b16 %v277
    %v653 = vunpack.c.h.b16 %v277
    %v654 = vunpack.c.l.b16 %v278
    %v655 = vunpack.c.h.b16 %v278
    %v656 = vunpack.c.l.b16 %v279
    %v657 = vunpack.c.h.b16 %v279
    %v658 = vunpack.c.l.b16 %v280
    %v659 = vunpack.c.h.b16 %v280
    %v660 = vunpack.c.l.b16 %v281
    %v661 = vunpack.c.h.b16 %v281
    %v662 = vunpack.c.l.b16 %v282
    %v663 = vunpack.c.h.b16 %v282
    %v664 = vunpack.c.l.b16 %v283
    %v665 = vunpack.c.h.b16 %v283
    %v666 = vunpack.c.l.b16 %v284
    %v667 = vunpack.c.h.b16 %v284
    %v668 = vunpack.c.l.b16 %v285
    %v669 = vunpack.c.h.b16 %v285
    %v670 = vunpack.c.l.b16 %v286
    %v671 = vunpack.c.h.b16 %v286
    %v672 = vunpack.c.l.b16 %v287
    %v673 = vunpack.c.h.b16 %v287
    %v674 = vunpack.c.l.b16 %v288
    %v675 = vunpack.c.h.b16 %v288
    %v676 = vunpack.c.l.b16 %v289
    %v677 = vunpack.c.h.b16 %v289
    %v678 = vunpack.c.l.b16 %v290
    %v679 = vunpack.c.h.b16 %v290
    %v680 = vunpack.c.l.b16 %v291
    %v681 = vunpack.c.h.b16 %v291
    %v682 = vunpack.c.l.b16 %v292
    %v683 = vunpack.c.h.b16 %v292
    %v684 = vunpack.c.l.b16 %v293
    %v685 = vunpack.c.h.b16 %v293
    %v686 = vunpack.c.l.b16 %v294
    %v687 = vunpack.c.h.b16 %v294
    %v688 = vunpack.c.l.b16 %v295
    %v689 = vunpack.c.h.b16 %v295
    %v690 = vunpack.c.l.b16 %v296
    %v691 = vunpack.c.h.b16 %v296
    %v692 = vpack.c.b16 %v438, %v436
    %v693 = vpack.c.b16 %v439, %v437
    %v694 = vpack.c.b16 %v442, %v440
    %v695 = vpack.c.b16 %v443, %v441
    %v696 = vpack.c.b16 %v446, %v444
    %v697 = vpack.c.b16 %v447, %v445
    %v698 = vpack.c.b16 %v450, %v448
    %v699 = vpack.c.b16 %v451, %v449
    %v700 = vpack.c.b16 %v454, %v452
    %v701 = vpack.c.b16 %v455, %v453
    %v702 = vpack.c.b16 %v458, %v456
    %v703 = vpack.c.b16 %v459, %v457
    %v704 = vpack.c.b16 %v462, %v460
    %v705 = vpack.c.b16 %v463, %v461
    %v706 = vpack.c.b16 %v466, %v464
    %v707 = vpack.c.b16 %v467, %v465
    %v708 = vpack.c.b16 %v470, %v468
    %v709 = vpack.c.b16 %v471, %v469
    %v710 = vpack.c.b16 %v474, %v472
    %v711 = vpack.c.b16 %v475, %v473
    %v712 = vpack.c.b16 %v478, %v476
    %v713 = vpack.c.b16 %v479, %v477
    %v714 = vpack.c.b16 %v482, %v480
    %v715 = vpack.c.b16 %v483, %v481
    %v716 = vpack.c.b16 %v486, %v484
    %v717 = vpack.c.b16 %v487, %v485
    %v718 = vpack.c.b16 %v490, %v488
    %v719 = vpack.c.b16 %v491, %v489
    %v720 = vpack.c.b16 %v494, %v492
    %v721 = vpack.c.b16 %v495, %v493
    %v722 = vpack.c.b16 %v498, %v496
    %v723 = vpack.c.b16 %v499, %v497
    %v724 = vpack.c.b16 %v502, %v500
    %v725 = vpack.c.b16 %v503, %v501
    %v726 = vpack.c.b16 %v506, %v504
    %v727 = vpack.c.b16 %v507, %v505
    %v728 = vpack.c.b16 %v510, %v508
    %v729 = vpack.c.b16 %v511, %v509
    %v730 = vpack.c.b16 %v514, %v512
    %v731 = vpack.c.b16 %v515, %v513
    %v732 = vpack.c.b16 %v518, %v516
    %v733 = vpack.c.b16 %v519, %v517
    %v734 = vpack.c.b16 %v522, %v520
    %v735 = vpack.c.b16 %v523, %v521
    %v736 = vpack.c.b16 %v526, %v524
    %v737 = vpack.c.b16 %v527, %v525
    %v738 = vpack.c.b16 %v530, %v528
    %v739 = vpack.c.b16 %v531, %v529
    %v740 = vpack.c.b16 %v534, %v532
    %v741 = vpack.c.b16 %v535, %v533
    %v742 = vpack.c.b16 %v538, %v536
    %v743 = vpack.c.b16 %v539, %v537
    %v744 = vpack.c.b16 %v542, %v540
    %v745 = vpack.c.b16 %v543, %v541
    %v746 = vpack.c.b16 %v546, %v544
    %v747 = vpack.c.b16 %v547, %v545
    %v748 = vpack.c.b16 %v550, %v548
    %v749 = vpack.c.b16 %v551, %v549
    %v750 = vpack.c.b16 %v554, %v552
    %v751 = vpack.c.b16 %v555, %v553
    %v752 = vpack.c.b16 %v558, %v556
    %v753 = vpack.c.b16 %v559, %v557
    %v754 = vpack.c.b16 %v562, %v560
    %v755 = vpack.c.b16 %v563, %v561
    %v756 = vpack.c.b16 %v566, %v564
    %v757 = vpack.c.b16 %v567, %v565
    %v758 = vpack.c.b16 %v570, %v568
    %v759 = vpack.c.b16 %v571, %v569
    %v760 = vpack.c.b16 %v574, %v572
    %v761 = vpack.c.b16 %v575, %v573
    %v762 = vpack.c.b16 %v578, %v576
    %v763 = vpack.c.b16 %v579, %v577
    %v764 = vpack.c.b16 %v582, %v580
    %v765 = vpack.c.b16 %v583, %v581
    %v766 = vpack.c.b16 %v586, %v584
    %v767 = vpack.c.b16 %v587, %v585
    %v768 = vpack.c.b16 %v590, %v588
    %v769 = vpack.c.b16 %v591, %v589
    %v770 = vpack.c.b16 %v594, %v592
    %v771 = vpack.c.b16 %v595, %v593
    %v772 = vpack.c.b16 %v598, %v596
    %v773 = vpack.c.b16 %v599, %v597
    %v774 = vpack.c.b16 %v602, %v600
    %v775 = vpack.c.b16 %v603, %v601
    %v776 = vpack.c.b16 %v606, %v604
    %v777 = vpack.c.b16 %v607, %v605
    %v778 = vpack.c.b16 %v610, %v608
    %v779 = vpack.c.b16 %v611, %v609
    %v780 = vpack.c.b16 %v614, %v612
    %v781 = vpack.c.b16 %v615, %v613
    %v782 = vpack.c.b16 %v618, %v616
    %v783 = vpack.c.b16 %v619, %v617
    %v784 = vpack.c.b16 %v622, %v620
    %v785 = vpack.c.b16 %v623, %v621
    %v786 = vpack.c.b16 %v626, %v624
    %v787 = vpack.c.b16 %v627, %v625
    %v788 = vpack.c.b16 %v630, %v628
    %v789 = vpack.c.b16 %v631, %v629
    %v790 = vpack.c.b16 %v634, %v632
    %v791 = vpack.c.b16 %v635, %v633
    %v792 = vpack.c.b16 %v638, %v636
    %v793 = vpack.c.b16 %v639, %v637
    %v794 = vpack.c.b16 %v642, %v640
    %v795 = vpack.c.b16 %v643, %v641
    %v796 = vpack.c.b16 %v646, %v644
    %v797 = vpack.c.b16 %v647, %v645
    %v798 = vpack.c.b16 %v650, %v648
    %v799 = vpack.c.b16 %v651, %v649
    %v800 = vpack.c.b16 %v654, %v652
    %v801 = vpack.c.b16 %v655, %v653
    %v802 = vpack.c.b16 %v658, %v656
    %v803 = vpack.c.b16 %v659, %v657
    %v804 = vpack.c.b16 %v662, %v660
    %v805 = vpack.c.b16 %v663, %v661
    %v806 = vpack.c.b16 %v666, %v664
    %v807 = vpack.c.b16 %v667, %v665
    %v808 = vpack.c.b16 %v670, %v668
    %v809 = vpack.c.b16 %v671, %v669
    %v810 = vpack.c.b16 %v674, %v672
    %v811 = vpack.c.b16 %v675, %v673
    %v812 = vpack.c.b16 %v678, %v676
    %v813 = vpack.c.b16 %v679, %v677
    %v814 = vpack.c.b16 %v682, %v680
    %v815 = vpack.c.b16 %v683, %v681
    %v816 = vpack.c.b16 %v686, %v684
    %v817 = vpack.c.b16 %v687, %v685
    %v818 = vpack.c.b16 %v690, %v688
    %v819 = vpack.c.b16 %v691, %v689
    %948 = vmatprep.subr.bf16.mxu0 %v707
    %949 = vmatpush1.bf16.msra.mxu0 %v706
    %950 = vmatprep.subr.bf16.mxu0 %v705
    %951 = vmatpush1.bf16.msra.mxu0 %v704
    %952 = vmatprep.subr.bf16.mxu0 %v703
    %953 = vmatpush1.bf16.msra.mxu0 %v702
    %954 = vmatprep.subr.bf16.mxu0 %v701
    %955 = vmatpush1.bf16.msra.mxu0 %v700
    %956 = vmatprep.subr.bf16.mxu0 %v699
    %957 = vmatpush1.bf16.msra.mxu0 %v698
    %958 = vmatprep.subr.bf16.mxu0 %v697
    %959 = vmatpush1.bf16.msra.mxu0 %v696
    %960 = vmatprep.subr.bf16.mxu0 %v695
    %961 = vmatpush1.bf16.msra.mxu0 %v694
    %962 = vmatprep.subr.bf16.mxu0 %v693
    %963 = vmatpush1.bf16.msra.mxu0 %v692
    %964 = vmatprep.subr.bf16.mxu0 %v723
    %965 = vmatpush2.bf16.msra.mxu0 %v722
    %966 = vmatprep.subr.bf16.mxu0 %v721
    %967 = vmatpush2.bf16.msra.mxu0 %v720
    %968 = vmatprep.subr.bf16.mxu0 %v719
    %969 = vmatpush2.bf16.msra.mxu0 %v718
    %970 = vmatprep.subr.bf16.mxu0 %v717
    %971 = vmatpush2.bf16.msra.mxu0 %v716
    %972 = vmatprep.subr.bf16.mxu0 %v715
    %973 = vmatpush2.bf16.msra.mxu0 %v714
    %974 = vmatprep.subr.bf16.mxu0 %v713
    %975 = vmatpush2.bf16.msra.mxu0 %v712
    %976 = vmatprep.subr.bf16.mxu0 %v711
    %977 = vmatpush2.bf16.msra.mxu0 %v710
    %978 = vmatprep.subr.bf16.mxu0 %v709
    %979 = vmatpush2.bf16.msra.mxu0 %v708
    %980 = vmatprep.mubr.bf16.mxu0 %v158
    %981 = vmatmul.mubr.bf16.gmra.mxu0 %v157
    %v982 = vpop.f32.mrf.mxu0
    %v983 = vadd.f32 %v301, %v982
    %v984 = vpop.f32.mrf.mxu0
    %v985 = vadd.f32 %v305, %v984
    %v986 = vpop.f32.mrf.mxu0
    %v987 = vpop.f32.mrf.mxu0
    %988 = vdwg.mxu0
    %989 = vmatprep.subr.bf16.mxu0 %v739
    %990 = vmatpush1.bf16.msra.mxu0 %v738
    %991 = vmatprep.subr.bf16.mxu0 %v737
    %992 = vmatpush1.bf16.msra.mxu0 %v736
    %993 = vmatprep.subr.bf16.mxu0 %v735
    %994 = vmatpush1.bf16.msra.mxu0 %v734
    %995 = vmatprep.subr.bf16.mxu0 %v733
    %996 = vmatpush1.bf16.msra.mxu0 %v732
    %997 = vmatprep.subr.bf16.mxu0 %v731
    %998 = vmatpush1.bf16.msra.mxu0 %v730
    %999 = vmatprep.subr.bf16.mxu0 %v729
    %1000 = vmatpush1.bf16.msra.mxu0 %v728
    %1001 = vmatprep.subr.bf16.mxu0 %v727
    %1002 = vmatpush1.bf16.msra.mxu0 %v726
    %1003 = vmatprep.subr.bf16.mxu0 %v725
    %1004 = vmatpush1.bf16.msra.mxu0 %v724
    %1005 = vmatprep.subr.bf16.mxu0 %v755
    %1006 = vmatpush2.bf16.msra.mxu0 %v754
    %1007 = vmatprep.subr.bf16.mxu0 %v753
    %1008 = vmatpush2.bf16.msra.mxu0 %v752
    %1009 = vmatprep.subr.bf16.mxu0 %v751
    %1010 = vmatpush2.bf16.msra.mxu0 %v750
    %1011 = vmatprep.subr.bf16.mxu0 %v749
    %1012 = vmatpush2.bf16.msra.mxu0 %v748
    %1013 = vmatprep.subr.bf16.mxu0 %v747
    %1014 = vmatpush2.bf16.msra.mxu0 %v746
    %1015 = vmatprep.subr.bf16.mxu0 %v745
    %1016 = vmatpush2.bf16.msra.mxu0 %v744
    %1017 = vmatprep.subr.bf16.mxu0 %v743
    %1018 = vmatpush2.bf16.msra.mxu0 %v742
    %1019 = vmatprep.subr.bf16.mxu0 %v741
    %1020 = vmatpush2.bf16.msra.mxu0 %v740
    %1021 = vmatprep.mubr.bf16.mxu0 %v160
    %1022 = vmatmul.mubr.bf16.gmra.mxu0 %v159
    %v1023 = vpop.f32.mrf.mxu0
    %v1024 = vadd.f32 %v983, %v1023
    %v1025 = vpop.f32.mrf.mxu0
    %v1026 = vadd.f32 %v985, %v1025
    %v1027 = vpop.f32.mrf.mxu0
    %v1028 = vpop.f32.mrf.mxu0
    %1029 = vdwg.mxu0
    %1030 = vmatprep.subr.bf16.mxu0 %v771
    %1031 = vmatpush1.bf16.msra.mxu0 %v770
    %1032 = vmatprep.subr.bf16.mxu0 %v769
    %1033 = vmatpush1.bf16.msra.mxu0 %v768
    %1034 = vmatprep.subr.bf16.mxu0 %v767
    %1035 = vmatpush1.bf16.msra.mxu0 %v766
    %1036 = vmatprep.subr.bf16.mxu0 %v765
    %1037 = vmatpush1.bf16.msra.mxu0 %v764
    %1038 = vmatprep.subr.bf16.mxu0 %v763
    %1039 = vmatpush1.bf16.msra.mxu0 %v762
    %1040 = vmatprep.subr.bf16.mxu0 %v761
    %1041 = vmatpush1.bf16.msra.mxu0 %v760
    %1042 = vmatprep.subr.bf16.mxu0 %v759
    %1043 = vmatpush1.bf16.msra.mxu0 %v758
    %1044 = vmatprep.subr.bf16.mxu0 %v757
    %1045 = vmatpush1.bf16.msra.mxu0 %v756
    %1046 = vmatprep.subr.bf16.mxu0 %v787
    %1047 = vmatpush2.bf16.msra.mxu0 %v786
    %1048 = vmatprep.subr.bf16.mxu0 %v785
    %1049 = vmatpush2.bf16.msra.mxu0 %v784
    %1050 = vmatprep.subr.bf16.mxu0 %v783
    %1051 = vmatpush2.bf16.msra.mxu0 %v782
    %1052 = vmatprep.subr.bf16.mxu0 %v781
    %1053 = vmatpush2.bf16.msra.mxu0 %v780
    %1054 = vmatprep.subr.bf16.mxu0 %v779
    %1055 = vmatpush2.bf16.msra.mxu0 %v778
    %1056 = vmatprep.subr.bf16.mxu0 %v777
    %1057 = vmatpush2.bf16.msra.mxu0 %v776
    %1058 = vmatprep.subr.bf16.mxu0 %v775
    %1059 = vmatpush2.bf16.msra.mxu0 %v774
    %1060 = vmatprep.subr.bf16.mxu0 %v773
    %1061 = vmatpush2.bf16.msra.mxu0 %v772
    %1062 = vmatprep.mubr.bf16.mxu0 %v162
    %1063 = vmatmul.mubr.bf16.gmra.mxu0 %v161
    %v1064 = vpop.f32.mrf.mxu0
    %v1065 = vadd.f32 %v1024, %v1064
    %v1066 = vpop.f32.mrf.mxu0
    %v1067 = vadd.f32 %v1026, %v1066
    %v1068 = vpop.f32.mrf.mxu0
    %v1069 = vpop.f32.mrf.mxu0
    %1070 = vdwg.mxu0
    %1071 = vmatprep.subr.bf16.mxu0 %v803
    %1072 = vmatpush1.bf16.msra.mxu0 %v802
    %1073 = vmatprep.subr.bf16.mxu0 %v801
    %1074 = vmatpush1.bf16.msra.mxu0 %v800
    %1075 = vmatprep.subr.bf16.mxu0 %v799
    %1076 = vmatpush1.bf16.msra.mxu0 %v798
    %1077 = vmatprep.subr.bf16.mxu0 %v797
    %1078 = vmatpush1.bf16.msra.mxu0 %v796
    %1079 = vmatprep.subr.bf16.mxu0 %v795
    %1080 = vmatpush1.bf16.msra.mxu0 %v794
    %1081 = vmatprep.subr.bf16.mxu0 %v793
    %1082 = vmatpush1.bf16.msra.mxu0 %v792
    %1083 = vmatprep.subr.bf16.mxu0 %v791
    %1084 = vmatpush1.bf16.msra.mxu0 %v790
    %1085 = vmatprep.subr.bf16.mxu0 %v789
    %1086 = vmatpush1.bf16.msra.mxu0 %v788
    %1087 = vmatprep.subr.bf16.mxu0 %v819
    %1088 = vmatpush2.bf16.msra.mxu0 %v818
    %1089 = vmatprep.subr.bf16.mxu0 %v817
    %1090 = vmatpush2.bf16.msra.mxu0 %v816
    %1091 = vmatprep.subr.bf16.mxu0 %v815
    %1092 = vmatpush2.bf16.msra.mxu0 %v814
    %1093 = vmatprep.subr.bf16.mxu0 %v813
    %1094 = vmatpush2.bf16.msra.mxu0 %v812
    %1095 = vmatprep.subr.bf16.mxu0 %v811
    %1096 = vmatpush2.bf16.msra.mxu0 %v810
    %1097 = vmatprep.subr.bf16.mxu0 %v809
    %1098 = vmatpush2.bf16.msra.mxu0 %v808
    %1099 = vmatprep.subr.bf16.mxu0 %v807
    %1100 = vmatpush2.bf16.msra.mxu0 %v806
    %1101 = vmatprep.subr.bf16.mxu0 %v805
    %1102 = vmatpush2.bf16.msra.mxu0 %v804
    %1103 = vmatprep.mubr.bf16.mxu0 %v164
    %1104 = vmatmul.mubr.bf16.gmra.mxu0 %v163
    %v1105 = vpop.f32.mrf.mxu0
    %v1106 = vadd.f32 %v1065, %v1105
    %v1107 = vpop.f32.mrf.mxu0
    %v1108 = vadd.f32 %v1067, %v1107
    %v1109 = vpop.f32.mrf.mxu0
    %v1110 = vpop.f32.mrf.mxu0
    %1111 = vdwg.mxu0
    %v1112 = vmax.f32 %v1106, 0.0
    %v1113 = vmax.f32 %v1108, 0.0
    %v1114 = vpack.c.bf16 %v1112, %v1112
    %v1115 = vpack.c.bf16 %v1113, %v1113
    %v1116 = vld [vmem:[%s3] sm:$0xf]
    %v1117 = vld [vmem:[%s3 + $0x4] sm:$0xf]
    %v1118 = vld [vmem:[%s3 + $0x8] sm:$0xf]
    %v1119 = vld [vmem:[%s3 + $0xc] sm:$0xf]
    %v1120 = vld [vmem:[%s3 + $0x10] sm:$0xf]
    %v1121 = vld [vmem:[%s3 + $0x14] sm:$0xf]
    %v1122 = vld [vmem:[%s3 + $0x18] sm:$0xf]
    %v1123 = vld [vmem:[%s3 + $0x1c] sm:$0xf]
    %v1124 = vld [vmem:[%s3 + $0x20] sm:$0xf]
    %v1125 = vld [vmem:[%s3 + $0x24] sm:$0xf]
    %v1126 = vld [vmem:[%s3 + $0x28] sm:$0xf]
    %v1127 = vld [vmem:[%s3 + $0x2c] sm:$0xf]
    %v1128 = vld [vmem:[%s3 + $0x30] sm:$0xf]
    %v1129 = vld [vmem:[%s3 + $0x34] sm:$0xf]
    %v1130 = vld [vmem:[%s3 + $0x38] sm:$0xf]
    %v1131 = vld [vmem:[%s3 + $0x3c] sm:$0xf]
    %v1132 = vld [vmem:[%s3 + $0x40] sm:$0xf]
    %v1133 = vld [vmem:[%s3 + $0x44] sm:$0xf]
    %v1134 = vld [vmem:[%s3 + $0x48] sm:$0xf]
    %v1135 = vld [vmem:[%s3 + $0x4c] sm:$0xf]
    %v1136 = vld [vmem:[%s3 + $0x50] sm:$0xf]
    %v1137 = vld [vmem:[%s3 + $0x54] sm:$0xf]
    %v1138 = vld [vmem:[%s3 + $0x58] sm:$0xf]
    %v1139 = vld [vmem:[%s3 + $0x5c] sm:$0xf]
    %v1140 = vld [vmem:[%s3 + $0x60] sm:$0xf]
    %v1141 = vld [vmem:[%s3 + $0x64] sm:$0xf]
    %v1142 = vld [vmem:[%s3 + $0x68] sm:$0xf]
    %v1143 = vld [vmem:[%s3 + $0x6c] sm:$0xf]
    %v1144 = vld [vmem:[%s3 + $0x70] sm:$0xf]
    %v1145 = vld [vmem:[%s3 + $0x74] sm:$0xf]
    %v1146 = vld [vmem:[%s3 + $0x78] sm:$0xf]
    %v1147 = vld [vmem:[%s3 + $0x7c] sm:$0xf]
    %v1149 = vlaneseq
    %v1150 = vshrl.u32 %v1149, 7
    %v1151 = vsub.s32 0, %v1150
    %v1152 = vrot.slane %v166, %v1151
    %v1186 = vunpack.c.l.b16 %v1116
    %v1187 = vunpack.c.l.b16 %v1117
    %v1188 = vunpack.c.l.b16 %v1118
    %v1189 = vunpack.c.l.b16 %v1119
    %v1190 = vunpack.c.l.b16 %v1120
    %v1191 = vunpack.c.l.b16 %v1121
    %v1192 = vunpack.c.l.b16 %v1122
    %v1193 = vunpack.c.l.b16 %v1123
    %v1194 = vunpack.c.l.b16 %v1124
    %v1195 = vunpack.c.l.b16 %v1125
    %v1196 = vunpack.c.l.b16 %v1126
    %v1197 = vunpack.c.l.b16 %v1127
    %v1198 = vunpack.c.l.b16 %v1128
    %v1199 = vunpack.c.l.b16 %v1129
    %v1200 = vunpack.c.l.b16 %v1130
    %v1201 = vunpack.c.l.b16 %v1131
    %v1202 = vunpack.c.l.b16 %v1132
    %v1203 = vunpack.c.l.b16 %v1133
    %v1204 = vunpack.c.l.b16 %v1134
    %v1205 = vunpack.c.l.b16 %v1135
    %v1206 = vunpack.c.l.b16 %v1136
    %v1207 = vunpack.c.l.b16 %v1137
    %v1208 = vunpack.c.l.b16 %v1138
    %v1209 = vunpack.c.l.b16 %v1139
    %v1210 = vunpack.c.l.b16 %v1140
    %v1211 = vunpack.c.l.b16 %v1141
    %v1212 = vunpack.c.l.b16 %v1142
    %v1213 = vunpack.c.l.b16 %v1143
    %v1214 = vunpack.c.l.b16 %v1144
    %v1215 = vunpack.c.l.b16 %v1145
    %v1216 = vunpack.c.l.b16 %v1146
    %v1217 = vunpack.c.l.b16 %v1147
    %v1218 = vpack.c.b16 %v1187, %v1186
    %v1219 = vpack.c.b16 %v1189, %v1188
    %v1220 = vpack.c.b16 %v1191, %v1190
    %v1221 = vpack.c.b16 %v1193, %v1192
    %v1222 = vpack.c.b16 %v1195, %v1194
    %v1223 = vpack.c.b16 %v1197, %v1196
    %v1224 = vpack.c.b16 %v1199, %v1198
    %v1225 = vpack.c.b16 %v1201, %v1200
    %v1226 = vpack.c.b16 %v1203, %v1202
    %v1227 = vpack.c.b16 %v1205, %v1204
    %v1228 = vpack.c.b16 %v1207, %v1206
    %v1229 = vpack.c.b16 %v1209, %v1208
    %v1230 = vpack.c.b16 %v1211, %v1210
    %v1231 = vpack.c.b16 %v1213, %v1212
    %v1232 = vpack.c.b16 %v1215, %v1214
    %v1233 = vpack.c.b16 %v1217, %v1216
    %1250 = vmatprep.subr.bf16.mxu0 0
    %1251 = vmatpush1.bf16.msra.mxu0 %v1225
    %1252 = vmatprep.subr.bf16.mxu0 0
    %1253 = vmatpush1.bf16.msra.mxu0 %v1224
    %1254 = vmatprep.subr.bf16.mxu0 0
    %1255 = vmatpush1.bf16.msra.mxu0 %v1223
    %1256 = vmatprep.subr.bf16.mxu0 0
    %1257 = vmatpush1.bf16.msra.mxu0 %v1222
    %1258 = vmatprep.subr.bf16.mxu0 0
    %1259 = vmatpush1.bf16.msra.mxu0 %v1221
    %1260 = vmatprep.subr.bf16.mxu0 0
    %1261 = vmatpush1.bf16.msra.mxu0 %v1220
    %1262 = vmatprep.subr.bf16.mxu0 0
    %1263 = vmatpush1.bf16.msra.mxu0 %v1219
    %1264 = vmatprep.subr.bf16.mxu0 0
    %1265 = vmatpush1.bf16.msra.mxu0 %v1218
    %1266 = vmatprep.subr.bf16.mxu0 0
    %1267 = vmatpush2.bf16.msra.mxu0 %v1233
    %1268 = vmatprep.subr.bf16.mxu0 0
    %1269 = vmatpush2.bf16.msra.mxu0 %v1232
    %1270 = vmatprep.subr.bf16.mxu0 0
    %1271 = vmatpush2.bf16.msra.mxu0 %v1231
    %1272 = vmatprep.subr.bf16.mxu0 0
    %1273 = vmatpush2.bf16.msra.mxu0 %v1230
    %1274 = vmatprep.subr.bf16.mxu0 0
    %1275 = vmatpush2.bf16.msra.mxu0 %v1229
    %1276 = vmatprep.subr.bf16.mxu0 0
    %1277 = vmatpush2.bf16.msra.mxu0 %v1228
    %1278 = vmatprep.subr.bf16.mxu0 0
    %1279 = vmatpush2.bf16.msra.mxu0 %v1227
    %1280 = vmatprep.subr.bf16.mxu0 0
    %1281 = vmatpush2.bf16.msra.mxu0 %v1226
    %1282 = vmatprep.mubr.bf16.mxu0 %v1115
    %1283 = vmatmul.mubr.bf16.gmra.mxu0 %v1114
    %v1284 = vpop.f32.mrf.mxu0
    %v1285 = vadd.f32 %v1152, %v1284
    %v1286 = vpop.f32.mrf.mxu0
    %v1287 = vpop.f32.mrf.mxu0
    %v1288 = vpop.f32.mrf.mxu0
    %1289 = vdwg.mxu0
    %1290 = vst [vmem:[%s7] sm:$0xf] %v1285
    %v1291 = vpack.c.bf16 %v1285, %v1285
    %v1292 = vld [vmem:[%s4] sm:$0xff]
    %v1293 = vld [vmem:[%s4 + $0x8] sm:$0xff]
    %v1294 = vld [vmem:[%s4 + $0x10] sm:$0xff]
    %v1295 = vld [vmem:[%s4 + $0x18] sm:$0xff]
    %v1296 = vld [vmem:[%s4 + $0x20] sm:$0xff]
    %v1297 = vld [vmem:[%s4 + $0x28] sm:$0xff]
    %v1298 = vld [vmem:[%s4 + $0x30] sm:$0xff]
    %v1299 = vld [vmem:[%s4 + $0x38] sm:$0xff]
    %v1300 = vld [vmem:[%s4 + $0x40] sm:$0xff]
    %v1301 = vld [vmem:[%s4 + $0x48] sm:$0xff]
    %v1302 = vld [vmem:[%s4 + $0x50] sm:$0xff]
    %v1303 = vld [vmem:[%s4 + $0x58] sm:$0xff]
    %v1304 = vld [vmem:[%s4 + $0x60] sm:$0xff]
    %v1305 = vld [vmem:[%s4 + $0x68] sm:$0xff]
    %v1306 = vld [vmem:[%s4 + $0x70] sm:$0xff]
    %v1307 = vld [vmem:[%s4 + $0x78] sm:$0xff]
    %v1309 = vlaneseq
    %v1310 = vshrl.u32 %v1309, 7
    %v1311 = vsub.s32 0, %v1310
    %v1312 = vrot.slane %v167, %v1311
    %v1313 = vlaneseq
    %v1314 = vshrl.u32 %v1313, 7
    %v1315 = vsub.s32 1, %v1314
    %v1316 = vrot.slane %v167, %v1315
    %v1335 = vunpack.c.l.b16 %v1292
    %v1336 = vunpack.c.h.b16 %v1292
    %v1337 = vunpack.c.l.b16 %v1293
    %v1338 = vunpack.c.h.b16 %v1293
    %v1339 = vunpack.c.l.b16 %v1294
    %v1340 = vunpack.c.h.b16 %v1294
    %v1341 = vunpack.c.l.b16 %v1295
    %v1342 = vunpack.c.h.b16 %v1295
    %v1343 = vunpack.c.l.b16 %v1296
    %v1344 = vunpack.c.h.b16 %v1296
    %v1345 = vunpack.c.l.b16 %v1297
    %v1346 = vunpack.c.h.b16 %v1297
    %v1347 = vunpack.c.l.b16 %v1298
    %v1348 = vunpack.c.h.b16 %v1298
    %v1349 = vunpack.c.l.b16 %v1299
    %v1350 = vunpack.c.h.b16 %v1299
    %v1351 = vunpack.c.l.b16 %v1300
    %v1352 = vunpack.c.h.b16 %v1300
    %v1353 = vunpack.c.l.b16 %v1301
    %v1354 = vunpack.c.h.b16 %v1301
    %v1355 = vunpack.c.l.b16 %v1302
    %v1356 = vunpack.c.h.b16 %v1302
    %v1357 = vunpack.c.l.b16 %v1303
    %v1358 = vunpack.c.h.b16 %v1303
    %v1359 = vunpack.c.l.b16 %v1304
    %v1360 = vunpack.c.h.b16 %v1304
    %v1361 = vunpack.c.l.b16 %v1305
    %v1362 = vunpack.c.h.b16 %v1305
    %v1363 = vunpack.c.l.b16 %v1306
    %v1364 = vunpack.c.h.b16 %v1306
    %v1365 = vunpack.c.l.b16 %v1307
    %v1366 = vunpack.c.h.b16 %v1307
    %v1367 = vpack.c.b16 %v1337, %v1335
    %v1368 = vpack.c.b16 %v1338, %v1336
    %v1369 = vpack.c.b16 %v1341, %v1339
    %v1370 = vpack.c.b16 %v1342, %v1340
    %v1371 = vpack.c.b16 %v1345, %v1343
    %v1372 = vpack.c.b16 %v1346, %v1344
    %v1373 = vpack.c.b16 %v1349, %v1347
    %v1374 = vpack.c.b16 %v1350, %v1348
    %v1375 = vpack.c.b16 %v1353, %v1351
    %v1376 = vpack.c.b16 %v1354, %v1352
    %v1377 = vpack.c.b16 %v1357, %v1355
    %v1378 = vpack.c.b16 %v1358, %v1356
    %v1379 = vpack.c.b16 %v1361, %v1359
    %v1380 = vpack.c.b16 %v1362, %v1360
    %v1381 = vpack.c.b16 %v1365, %v1363
    %v1382 = vpack.c.b16 %v1366, %v1364
    %1399 = vmatprep.subr.bf16.mxu0 %v1382
    %1400 = vmatpush1.bf16.msra.mxu0 %v1381
    %1401 = vmatprep.subr.bf16.mxu0 %v1380
    %1402 = vmatpush1.bf16.msra.mxu0 %v1379
    %1403 = vmatprep.subr.bf16.mxu0 %v1378
    %1404 = vmatpush1.bf16.msra.mxu0 %v1377
    %1405 = vmatprep.subr.bf16.mxu0 %v1376
    %1406 = vmatpush1.bf16.msra.mxu0 %v1375
    %1407 = vmatprep.subr.bf16.mxu0 %v1374
    %1408 = vmatpush1.bf16.msra.mxu0 %v1373
    %1409 = vmatprep.subr.bf16.mxu0 %v1372
    %1410 = vmatpush1.bf16.msra.mxu0 %v1371
    %1411 = vmatprep.subr.bf16.mxu0 %v1370
    %1412 = vmatpush1.bf16.msra.mxu0 %v1369
    %1413 = vmatprep.subr.bf16.mxu0 %v1368
    %1414 = vmatpush1.bf16.msra.mxu0 %v1367
    %1415 = vmatprep.subr.bf16.mxu0 0
    %1416 = vmatpush2.bf16.msra.mxu0 0
    %1417 = vmatprep.subr.bf16.mxu0 0
    %1418 = vmatpush2.bf16.msra.mxu0 0
    %1419 = vmatprep.subr.bf16.mxu0 0
    %1420 = vmatpush2.bf16.msra.mxu0 0
    %1421 = vmatprep.subr.bf16.mxu0 0
    %1422 = vmatpush2.bf16.msra.mxu0 0
    %1423 = vmatprep.subr.bf16.mxu0 0
    %1424 = vmatpush2.bf16.msra.mxu0 0
    %1425 = vmatprep.subr.bf16.mxu0 0
    %1426 = vmatpush2.bf16.msra.mxu0 0
    %1427 = vmatprep.subr.bf16.mxu0 0
    %1428 = vmatpush2.bf16.msra.mxu0 0
    %1429 = vmatprep.subr.bf16.mxu0 0
    %1430 = vmatpush2.bf16.msra.mxu0 0
    %1431 = vmatprep.mubr.bf16.mxu0 0
    %1432 = vmatmul.mubr.bf16.gmra.mxu0 %v1291
    %v1433 = vpop.f32.mrf.mxu0
    %v1434 = vadd.f32 %v1312, %v1433
    %v1435 = vpop.f32.mrf.mxu0
    %v1436 = vadd.f32 %v1316, %v1435
    %v1437 = vpop.f32.mrf.mxu0
    %v1438 = vpop.f32.mrf.mxu0
    %1439 = vdwg.mxu0
    %v1440 = vmax.f32 %v1434, 0.0
    %v1441 = vmax.f32 %v1436, 0.0
    %v1442 = vpack.c.bf16 %v1440, %v1440
    %v1443 = vpack.c.bf16 %v1441, %v1441
    %v1444 = vld [vmem:[#allocation5] sm:$0xff]
    %v1445 = vld [vmem:[#allocation5 + $0x8] sm:$0xff]
    %v1446 = vld [vmem:[#allocation5 + $0x10] sm:$0xff]
    %v1447 = vld [vmem:[#allocation5 + $0x18] sm:$0xff]
    %v1448 = vld [vmem:[#allocation5 + $0x20] sm:$0xff]
    %v1449 = vld [vmem:[#allocation5 + $0x28] sm:$0xff]
    %v1450 = vld [vmem:[#allocation5 + $0x30] sm:$0xff]
    %v1451 = vld [vmem:[#allocation5 + $0x38] sm:$0xff]
    %v1452 = vld [vmem:[#allocation5 + $0x40] sm:$0xff]
    %v1453 = vld [vmem:[#allocation5 + $0x48] sm:$0xff]
    %v1454 = vld [vmem:[#allocation5 + $0x50] sm:$0xff]
    %v1455 = vld [vmem:[#allocation5 + $0x58] sm:$0xff]
    %v1456 = vld [vmem:[#allocation5 + $0x60] sm:$0xff]
    %v1457 = vld [vmem:[#allocation5 + $0x68] sm:$0xff]
    %v1458 = vld [vmem:[#allocation5 + $0x70] sm:$0xff]
    %v1459 = vld [vmem:[#allocation5 + $0x78] sm:$0xff]
    %v1460 = vld [vmem:[#allocation5 + $0x80] sm:$0xff]
    %v1461 = vld [vmem:[#allocation5 + $0x88] sm:$0xff]
    %v1462 = vld [vmem:[#allocation5 + $0x90] sm:$0xff]
    %v1463 = vld [vmem:[#allocation5 + $0x98] sm:$0xff]
    %v1464 = vld [vmem:[#allocation5 + $0xa0] sm:$0xff]
    %v1465 = vld [vmem:[#allocation5 + $0xa8] sm:$0xff]
    %v1466 = vld [vmem:[#allocation5 + $0xb0] sm:$0xff]
    %v1467 = vld [vmem:[#allocation5 + $0xb8] sm:$0xff]
    %v1468 = vld [vmem:[#allocation5 + $0xc0] sm:$0xff]
    %v1469 = vld [vmem:[#allocation5 + $0xc8] sm:$0xff]
    %v1470 = vld [vmem:[#allocation5 + $0xd0] sm:$0xff]
    %v1471 = vld [vmem:[#allocation5 + $0xd8] sm:$0xff]
    %v1472 = vld [vmem:[#allocation5 + $0xe0] sm:$0xff]
    %v1473 = vld [vmem:[#allocation5 + $0xe8] sm:$0xff]
    %v1474 = vld [vmem:[#allocation5 + $0xf0] sm:$0xff]
    %v1475 = vld [vmem:[#allocation5 + $0xf8] sm:$0xff]
    %v1476 = vld [vmem:[#allocation5 + $0x100] sm:$0xff]
    %v1477 = vld [vmem:[#allocation5 + $0x108] sm:$0xff]
    %v1478 = vld [vmem:[#allocation5 + $0x110] sm:$0xff]
    %v1479 = vld [vmem:[#allocation5 + $0x118] sm:$0xff]
    %v1480 = vld [vmem:[#allocation5 + $0x120] sm:$0xff]
    %v1481 = vld [vmem:[#allocation5 + $0x128] sm:$0xff]
    %v1482 = vld [vmem:[#allocation5 + $0x130] sm:$0xff]
    %v1483 = vld [vmem:[#allocation5 + $0x138] sm:$0xff]
    %v1484 = vld [vmem:[#allocation5 + $0x140] sm:$0xff]
    %v1485 = vld [vmem:[#allocation5 + $0x148] sm:$0xff]
    %v1486 = vld [vmem:[#allocation5 + $0x150] sm:$0xff]
    %v1487 = vld [vmem:[#allocation5 + $0x158] sm:$0xff]
    %v1488 = vld [vmem:[#allocation5 + $0x160] sm:$0xff]
    %v1489 = vld [vmem:[#allocation5 + $0x168] sm:$0xff]
    %v1490 = vld [vmem:[#allocation5 + $0x170] sm:$0xff]
    %v1491 = vld [vmem:[#allocation5 + $0x178] sm:$0xff]
    %v1492 = vld [vmem:[#allocation5 + $0x180] sm:$0xff]
    %v1493 = vld [vmem:[#allocation5 + $0x188] sm:$0xff]
    %v1494 = vld [vmem:[#allocation5 + $0x190] sm:$0xff]
    %v1495 = vld [vmem:[#allocation5 + $0x198] sm:$0xff]
    %v1496 = vld [vmem:[#allocation5 + $0x1a0] sm:$0xff]
    %v1497 = vld [vmem:[#allocation5 + $0x1a8] sm:$0xff]
    %v1498 = vld [vmem:[#allocation5 + $0x1b0] sm:$0xff]
    %v1499 = vld [vmem:[#allocation5 + $0x1b8] sm:$0xff]
    %v1500 = vld [vmem:[#allocation5 + $0x1c0] sm:$0xff]
    %v1501 = vld [vmem:[#allocation5 + $0x1c8] sm:$0xff]
    %v1502 = vld [vmem:[#allocation5 + $0x1d0] sm:$0xff]
    %v1503 = vld [vmem:[#allocation5 + $0x1d8] sm:$0xff]
    %v1504 = vld [vmem:[#allocation5 + $0x1e0] sm:$0xff]
    %v1505 = vld [vmem:[#allocation5 + $0x1e8] sm:$0xff]
    %v1506 = vld [vmem:[#allocation5 + $0x1f0] sm:$0xff]
    %v1507 = vld [vmem:[#allocation5 + $0x1f8] sm:$0xff]
    %v1508 = vld [vmem:[#allocation5 + $0x200] sm:$0xff]
    %v1509 = vld [vmem:[#allocation5 + $0x208] sm:$0xff]
    %v1510 = vld [vmem:[#allocation5 + $0x210] sm:$0xff]
    %v1511 = vld [vmem:[#allocation5 + $0x218] sm:$0xff]
    %v1512 = vld [vmem:[#allocation5 + $0x220] sm:$0xff]
    %v1513 = vld [vmem:[#allocation5 + $0x228] sm:$0xff]
    %v1514 = vld [vmem:[#allocation5 + $0x230] sm:$0xff]
    %v1515 = vld [vmem:[#allocation5 + $0x238] sm:$0xff]
    %v1516 = vld [vmem:[#allocation5 + $0x240] sm:$0xff]
    %v1517 = vld [vmem:[#allocation5 + $0x248] sm:$0xff]
    %v1518 = vld [vmem:[#allocation5 + $0x250] sm:$0xff]
    %v1519 = vld [vmem:[#allocation5 + $0x258] sm:$0xff]
    %v1520 = vld [vmem:[#allocation5 + $0x260] sm:$0xff]
    %v1521 = vld [vmem:[#allocation5 + $0x268] sm:$0xff]
    %v1522 = vld [vmem:[#allocation5 + $0x270] sm:$0xff]
    %v1523 = vld [vmem:[#allocation5 + $0x278] sm:$0xff]
    %v1524 = vld [vmem:[#allocation5 + $0x280] sm:$0xff]
    %v1525 = vld [vmem:[#allocation5 + $0x288] sm:$0xff]
    %v1526 = vld [vmem:[#allocation5 + $0x290] sm:$0xff]
    %v1527 = vld [vmem:[#allocation5 + $0x298] sm:$0xff]
    %v1528 = vld [vmem:[#allocation5 + $0x2a0] sm:$0xff]
    %v1529 = vld [vmem:[#allocation5 + $0x2a8] sm:$0xff]
    %v1530 = vld [vmem:[#allocation5 + $0x2b0] sm:$0xff]
    %v1531 = vld [vmem:[#allocation5 + $0x2b8] sm:$0xff]
    %v1532 = vld [vmem:[#allocation5 + $0x2c0] sm:$0xff]
    %v1533 = vld [vmem:[#allocation5 + $0x2c8] sm:$0xff]
    %v1534 = vld [vmem:[#allocation5 + $0x2d0] sm:$0xff]
    %v1535 = vld [vmem:[#allocation5 + $0x2d8] sm:$0xff]
    %v1536 = vld [vmem:[#allocation5 + $0x2e0] sm:$0xff]
    %v1537 = vld [vmem:[#allocation5 + $0x2e8] sm:$0xff]
    %v1538 = vld [vmem:[#allocation5 + $0x2f0] sm:$0xff]
    %v1539 = vld [vmem:[#allocation5 + $0x2f8] sm:$0xff]
    %v1540 = vld [vmem:[#allocation5 + $0x300] sm:$0xff]
    %v1541 = vld [vmem:[#allocation5 + $0x308] sm:$0xff]
    %v1542 = vld [vmem:[#allocation5 + $0x310] sm:$0xff]
    %v1543 = vld [vmem:[#allocation5 + $0x318] sm:$0xff]
    %v1544 = vld [vmem:[#allocation5 + $0x320] sm:$0xff]
    %v1545 = vld [vmem:[#allocation5 + $0x328] sm:$0xff]
    %v1546 = vld [vmem:[#allocation5 + $0x330] sm:$0xff]
    %v1547 = vld [vmem:[#allocation5 + $0x338] sm:$0xff]
    %v1548 = vld [vmem:[#allocation5 + $0x340] sm:$0xff]
    %v1549 = vld [vmem:[#allocation5 + $0x348] sm:$0xff]
    %v1550 = vld [vmem:[#allocation5 + $0x350] sm:$0xff]
    %v1551 = vld [vmem:[#allocation5 + $0x358] sm:$0xff]
    %v1552 = vld [vmem:[#allocation5 + $0x360] sm:$0xff]
    %v1553 = vld [vmem:[#allocation5 + $0x368] sm:$0xff]
    %v1554 = vld [vmem:[#allocation5 + $0x370] sm:$0xff]
    %v1555 = vld [vmem:[#allocation5 + $0x378] sm:$0xff]
    %v1556 = vld [vmem:[#allocation5 + $0x380] sm:$0xff]
    %v1557 = vld [vmem:[#allocation5 + $0x388] sm:$0xff]
    %v1558 = vld [vmem:[#allocation5 + $0x390] sm:$0xff]
    %v1559 = vld [vmem:[#allocation5 + $0x398] sm:$0xff]
    %v1560 = vld [vmem:[#allocation5 + $0x3a0] sm:$0xff]
    %v1561 = vld [vmem:[#allocation5 + $0x3a8] sm:$0xff]
    %v1562 = vld [vmem:[#allocation5 + $0x3b0] sm:$0xff]
    %v1563 = vld [vmem:[#allocation5 + $0x3b8] sm:$0xff]
    %v1564 = vld [vmem:[#allocation5 + $0x3c0] sm:$0xff]
    %v1565 = vld [vmem:[#allocation5 + $0x3c8] sm:$0xff]
    %v1566 = vld [vmem:[#allocation5 + $0x3d0] sm:$0xff]
    %v1567 = vld [vmem:[#allocation5 + $0x3d8] sm:$0xff]
    %v1568 = vld [vmem:[#allocation5 + $0x3e0] sm:$0xff]
    %v1569 = vld [vmem:[#allocation5 + $0x3e8] sm:$0xff]
    %v1570 = vld [vmem:[#allocation5 + $0x3f0] sm:$0xff]
    %v1571 = vld [vmem:[#allocation5 + $0x3f8] sm:$0xff]
    %v1573 = vlaneseq
    %v1574 = vshrl.u32 %v1573, 7
    %v1575 = vsub.s32 0, %v1574
    %v1576 = vrot.slane %v168, %v1575
    %v1577 = vlaneseq
    %v1578 = vshrl.u32 %v1577, 7
    %v1579 = vsub.s32 1, %v1578
    %v1580 = vrot.slane %v168, %v1579
    %v1581 = vlaneseq
    %v1582 = vshrl.u32 %v1581, 7
    %v1583 = vsub.s32 2, %v1582
    %v1584 = vrot.slane %v168, %v1583
    %v1585 = vlaneseq
    %v1586 = vshrl.u32 %v1585, 7
    %v1587 = vsub.s32 3, %v1586
    %v1588 = vrot.slane %v168, %v1587
    %v1589 = vlaneseq
    %v1590 = vshrl.u32 %v1589, 7
    %v1591 = vsub.s32 4, %v1590
    %v1592 = vrot.slane %v168, %v1591
    %v1593 = vlaneseq
    %v1594 = vshrl.u32 %v1593, 7
    %v1595 = vsub.s32 5, %v1594
    %v1596 = vrot.slane %v168, %v1595
    %v1597 = vlaneseq
    %v1598 = vshrl.u32 %v1597, 7
    %v1599 = vsub.s32 6, %v1598
    %v1600 = vrot.slane %v168, %v1599
    %v1601 = vlaneseq
    %v1602 = vshrl.u32 %v1601, 7
    %v1603 = vsub.s32 7, %v1602
    %v1604 = vrot.slane %v168, %v1603
    %v1741 = vunpack.c.l.b16 %v1444
    %v1742 = vunpack.c.h.b16 %v1444
    %v1743 = vunpack.c.l.b16 %v1445
    %v1744 = vunpack.c.h.b16 %v1445
    %v1745 = vunpack.c.l.b16 %v1446
    %v1746 = vunpack.c.h.b16 %v1446
    %v1747 = vunpack.c.l.b16 %v1447
    %v1748 = vunpack.c.h.b16 %v1447
    %v1749 = vunpack.c.l.b16 %v1448
    %v1750 = vunpack.c.h.b16 %v1448
    %v1751 = vunpack.c.l.b16 %v1449
    %v1752 = vunpack.c.h.b16 %v1449
    %v1753 = vunpack.c.l.b16 %v1450
    %v1754 = vunpack.c.h.b16 %v1450
    %v1755 = vunpack.c.l.b16 %v1451
    %v1756 = vunpack.c.h.b16 %v1451
    %v1757 = vunpack.c.l.b16 %v1452
    %v1758 = vunpack.c.h.b16 %v1452
    %v1759 = vunpack.c.l.b16 %v1453
    %v1760 = vunpack.c.h.b16 %v1453
    %v1761 = vunpack.c.l.b16 %v1454
    %v1762 = vunpack.c.h.b16 %v1454
    %v1763 = vunpack.c.l.b16 %v1455
    %v1764 = vunpack.c.h.b16 %v1455
    %v1765 = vunpack.c.l.b16 %v1456
    %v1766 = vunpack.c.h.b16 %v1456
    %v1767 = vunpack.c.l.b16 %v1457
    %v1768 = vunpack.c.h.b16 %v1457
    %v1769 = vunpack.c.l.b16 %v1458
    %v1770 = vunpack.c.h.b16 %v1458
    %v1771 = vunpack.c.l.b16 %v1459
    %v1772 = vunpack.c.h.b16 %v1459
    %v1773 = vunpack.c.l.b16 %v1460
    %v1774 = vunpack.c.h.b16 %v1460
    %v1775 = vunpack.c.l.b16 %v1461
    %v1776 = vunpack.c.h.b16 %v1461
    %v1777 = vunpack.c.l.b16 %v1462
    %v1778 = vunpack.c.h.b16 %v1462
    %v1779 = vunpack.c.l.b16 %v1463
    %v1780 = vunpack.c.h.b16 %v1463
    %v1781 = vunpack.c.l.b16 %v1464
    %v1782 = vunpack.c.h.b16 %v1464
    %v1783 = vunpack.c.l.b16 %v1465
    %v1784 = vunpack.c.h.b16 %v1465
    %v1785 = vunpack.c.l.b16 %v1466
    %v1786 = vunpack.c.h.b16 %v1466
    %v1787 = vunpack.c.l.b16 %v1467
    %v1788 = vunpack.c.h.b16 %v1467
    %v1789 = vunpack.c.l.b16 %v1468
    %v1790 = vunpack.c.h.b16 %v1468
    %v1791 = vunpack.c.l.b16 %v1469
    %v1792 = vunpack.c.h.b16 %v1469
    %v1793 = vunpack.c.l.b16 %v1470
    %v1794 = vunpack.c.h.b16 %v1470
    %v1795 = vunpack.c.l.b16 %v1471
    %v1796 = vunpack.c.h.b16 %v1471
    %v1797 = vunpack.c.l.b16 %v1472
    %v1798 = vunpack.c.h.b16 %v1472
    %v1799 = vunpack.c.l.b16 %v1473
    %v1800 = vunpack.c.h.b16 %v1473
    %v1801 = vunpack.c.l.b16 %v1474
    %v1802 = vunpack.c.h.b16 %v1474
    %v1803 = vunpack.c.l.b16 %v1475
    %v1804 = vunpack.c.h.b16 %v1475
    %v1805 = vunpack.c.l.b16 %v1476
    %v1806 = vunpack.c.h.b16 %v1476
    %v1807 = vunpack.c.l.b16 %v1477
    %v1808 = vunpack.c.h.b16 %v1477
    %v1809 = vunpack.c.l.b16 %v1478
    %v1810 = vunpack.c.h.b16 %v1478
    %v1811 = vunpack.c.l.b16 %v1479
    %v1812 = vunpack.c.h.b16 %v1479
    %v1813 = vunpack.c.l.b16 %v1480
    %v1814 = vunpack.c.h.b16 %v1480
    %v1815 = vunpack.c.l.b16 %v1481
    %v1816 = vunpack.c.h.b16 %v1481
    %v1817 = vunpack.c.l.b16 %v1482
    %v1818 = vunpack.c.h.b16 %v1482
    %v1819 = vunpack.c.l.b16 %v1483
    %v1820 = vunpack.c.h.b16 %v1483
    %v1821 = vunpack.c.l.b16 %v1484
    %v1822 = vunpack.c.h.b16 %v1484
    %v1823 = vunpack.c.l.b16 %v1485
    %v1824 = vunpack.c.h.b16 %v1485
    %v1825 = vunpack.c.l.b16 %v1486
    %v1826 = vunpack.c.h.b16 %v1486
    %v1827 = vunpack.c.l.b16 %v1487
    %v1828 = vunpack.c.h.b16 %v1487
    %v1829 = vunpack.c.l.b16 %v1488
    %v1830 = vunpack.c.h.b16 %v1488
    %v1831 = vunpack.c.l.b16 %v1489
    %v1832 = vunpack.c.h.b16 %v1489
    %v1833 = vunpack.c.l.b16 %v1490
    %v1834 = vunpack.c.h.b16 %v1490
    %v1835 = vunpack.c.l.b16 %v1491
    %v1836 = vunpack.c.h.b16 %v1491
    %v1837 = vunpack.c.l.b16 %v1492
    %v1838 = vunpack.c.h.b16 %v1492
    %v1839 = vunpack.c.l.b16 %v1493
    %v1840 = vunpack.c.h.b16 %v1493
    %v1841 = vunpack.c.l.b16 %v1494
    %v1842 = vunpack.c.h.b16 %v1494
    %v1843 = vunpack.c.l.b16 %v1495
    %v1844 = vunpack.c.h.b16 %v1495
    %v1845 = vunpack.c.l.b16 %v1496
    %v1846 = vunpack.c.h.b16 %v1496
    %v1847 = vunpack.c.l.b16 %v1497
    %v1848 = vunpack.c.h.b16 %v1497
    %v1849 = vunpack.c.l.b16 %v1498
    %v1850 = vunpack.c.h.b16 %v1498
    %v1851 = vunpack.c.l.b16 %v1499
    %v1852 = vunpack.c.h.b16 %v1499
    %v1853 = vunpack.c.l.b16 %v1500
    %v1854 = vunpack.c.h.b16 %v1500
    %v1855 = vunpack.c.l.b16 %v1501
    %v1856 = vunpack.c.h.b16 %v1501
    %v1857 = vunpack.c.l.b16 %v1502
    %v1858 = vunpack.c.h.b16 %v1502
    %v1859 = vunpack.c.l.b16 %v1503
    %v1860 = vunpack.c.h.b16 %v1503
    %v1861 = vunpack.c.l.b16 %v1504
    %v1862 = vunpack.c.h.b16 %v1504
    %v1863 = vunpack.c.l.b16 %v1505
    %v1864 = vunpack.c.h.b16 %v1505
    %v1865 = vunpack.c.l.b16 %v1506
    %v1866 = vunpack.c.h.b16 %v1506
    %v1867 = vunpack.c.l.b16 %v1507
    %v1868 = vunpack.c.h.b16 %v1507
    %v1869 = vunpack.c.l.b16 %v1508
    %v1870 = vunpack.c.h.b16 %v1508
    %v1871 = vunpack.c.l.b16 %v1509
    %v1872 = vunpack.c.h.b16 %v1509
    %v1873 = vunpack.c.l.b16 %v1510
    %v1874 = vunpack.c.h.b16 %v1510
    %v1875 = vunpack.c.l.b16 %v1511
    %v1876 = vunpack.c.h.b16 %v1511
    %v1877 = vunpack.c.l.b16 %v1512
    %v1878 = vunpack.c.h.b16 %v1512
    %v1879 = vunpack.c.l.b16 %v1513
    %v1880 = vunpack.c.h.b16 %v1513
    %v1881 = vunpack.c.l.b16 %v1514
    %v1882 = vunpack.c.h.b16 %v1514
    %v1883 = vunpack.c.l.b16 %v1515
    %v1884 = vunpack.c.h.b16 %v1515
    %v1885 = vunpack.c.l.b16 %v1516
    %v1886 = vunpack.c.h.b16 %v1516
    %v1887 = vunpack.c.l.b16 %v1517
    %v1888 = vunpack.c.h.b16 %v1517
    %v1889 = vunpack.c.l.b16 %v1518
    %v1890 = vunpack.c.h.b16 %v1518
    %v1891 = vunpack.c.l.b16 %v1519
    %v1892 = vunpack.c.h.b16 %v1519
    %v1893 = vunpack.c.l.b16 %v1520
    %v1894 = vunpack.c.h.b16 %v1520
    %v1895 = vunpack.c.l.b16 %v1521
    %v1896 = vunpack.c.h.b16 %v1521
    %v1897 = vunpack.c.l.b16 %v1522
    %v1898 = vunpack.c.h.b16 %v1522
    %v1899 = vunpack.c.l.b16 %v1523
    %v1900 = vunpack.c.h.b16 %v1523
    %v1901 = vunpack.c.l.b16 %v1524
    %v1902 = vunpack.c.h.b16 %v1524
    %v1903 = vunpack.c.l.b16 %v1525
    %v1904 = vunpack.c.h.b16 %v1525
    %v1905 = vunpack.c.l.b16 %v1526
    %v1906 = vunpack.c.h.b16 %v1526
    %v1907 = vunpack.c.l.b16 %v1527
    %v1908 = vunpack.c.h.b16 %v1527
    %v1909 = vunpack.c.l.b16 %v1528
    %v1910 = vunpack.c.h.b16 %v1528
    %v1911 = vunpack.c.l.b16 %v1529
    %v1912 = vunpack.c.h.b16 %v1529
    %v1913 = vunpack.c.l.b16 %v1530
    %v1914 = vunpack.c.h.b16 %v1530
    %v1915 = vunpack.c.l.b16 %v1531
    %v1916 = vunpack.c.h.b16 %v1531
    %v1917 = vunpack.c.l.b16 %v1532
    %v1918 = vunpack.c.h.b16 %v1532
    %v1919 = vunpack.c.l.b16 %v1533
    %v1920 = vunpack.c.h.b16 %v1533
    %v1921 = vunpack.c.l.b16 %v1534
    %v1922 = vunpack.c.h.b16 %v1534
    %v1923 = vunpack.c.l.b16 %v1535
    %v1924 = vunpack.c.h.b16 %v1535
    %v1925 = vunpack.c.l.b16 %v1536
    %v1926 = vunpack.c.h.b16 %v1536
    %v1927 = vunpack.c.l.b16 %v1537
    %v1928 = vunpack.c.h.b16 %v1537
    %v1929 = vunpack.c.l.b16 %v1538
    %v1930 = vunpack.c.h.b16 %v1538
    %v1931 = vunpack.c.l.b16 %v1539
    %v1932 = vunpack.c.h.b16 %v1539
    %v1933 = vunpack.c.l.b16 %v1540
    %v1934 = vunpack.c.h.b16 %v1540
    %v1935 = vunpack.c.l.b16 %v1541
    %v1936 = vunpack.c.h.b16 %v1541
    %v1937 = vunpack.c.l.b16 %v1542
    %v1938 = vunpack.c.h.b16 %v1542
    %v1939 = vunpack.c.l.b16 %v1543
    %v1940 = vunpack.c.h.b16 %v1543
    %v1941 = vunpack.c.l.b16 %v1544
    %v1942 = vunpack.c.h.b16 %v1544
    %v1943 = vunpack.c.l.b16 %v1545
    %v1944 = vunpack.c.h.b16 %v1545
    %v1945 = vunpack.c.l.b16 %v1546
    %v1946 = vunpack.c.h.b16 %v1546
    %v1947 = vunpack.c.l.b16 %v1547
    %v1948 = vunpack.c.h.b16 %v1547
    %v1949 = vunpack.c.l.b16 %v1548
    %v1950 = vunpack.c.h.b16 %v1548
    %v1951 = vunpack.c.l.b16 %v1549
    %v1952 = vunpack.c.h.b16 %v1549
    %v1953 = vunpack.c.l.b16 %v1550
    %v1954 = vunpack.c.h.b16 %v1550
    %v1955 = vunpack.c.l.b16 %v1551
    %v1956 = vunpack.c.h.b16 %v1551
    %v1957 = vunpack.c.l.b16 %v1552
    %v1958 = vunpack.c.h.b16 %v1552
    %v1959 = vunpack.c.l.b16 %v1553
    %v1960 = vunpack.c.h.b16 %v1553
    %v1961 = vunpack.c.l.b16 %v1554
    %v1962 = vunpack.c.h.b16 %v1554
    %v1963 = vunpack.c.l.b16 %v1555
    %v1964 = vunpack.c.h.b16 %v1555
    %v1965 = vunpack.c.l.b16 %v1556
    %v1966 = vunpack.c.h.b16 %v1556
    %v1967 = vunpack.c.l.b16 %v1557
    %v1968 = vunpack.c.h.b16 %v1557
    %v1969 = vunpack.c.l.b16 %v1558
    %v1970 = vunpack.c.h.b16 %v1558
    %v1971 = vunpack.c.l.b16 %v1559
    %v1972 = vunpack.c.h.b16 %v1559
    %v1973 = vunpack.c.l.b16 %v1560
    %v1974 = vunpack.c.h.b16 %v1560
    %v1975 = vunpack.c.l.b16 %v1561
    %v1976 = vunpack.c.h.b16 %v1561
    %v1977 = vunpack.c.l.b16 %v1562
    %v1978 = vunpack.c.h.b16 %v1562
    %v1979 = vunpack.c.l.b16 %v1563
    %v1980 = vunpack.c.h.b16 %v1563
    %v1981 = vunpack.c.l.b16 %v1564
    %v1982 = vunpack.c.h.b16 %v1564
    %v1983 = vunpack.c.l.b16 %v1565
    %v1984 = vunpack.c.h.b16 %v1565
    %v1985 = vunpack.c.l.b16 %v1566
    %v1986 = vunpack.c.h.b16 %v1566
    %v1987 = vunpack.c.l.b16 %v1567
    %v1988 = vunpack.c.h.b16 %v1567
    %v1989 = vunpack.c.l.b16 %v1568
    %v1990 = vunpack.c.h.b16 %v1568
    %v1991 = vunpack.c.l.b16 %v1569
    %v1992 = vunpack.c.h.b16 %v1569
    %v1993 = vunpack.c.l.b16 %v1570
    %v1994 = vunpack.c.h.b16 %v1570
    %v1995 = vunpack.c.l.b16 %v1571
    %v1996 = vunpack.c.h.b16 %v1571
    %v1997 = vpack.c.b16 %v1749, %v1741
    %v1998 = vpack.c.b16 %v1750, %v1742
    %v1999 = vpack.c.b16 %v1751, %v1743
    %v2000 = vpack.c.b16 %v1752, %v1744
    %v2001 = vpack.c.b16 %v1753, %v1745
    %v2002 = vpack.c.b16 %v1754, %v1746
    %v2003 = vpack.c.b16 %v1755, %v1747
    %v2004 = vpack.c.b16 %v1756, %v1748
    %v2005 = vpack.c.b16 %v1765, %v1757
    %v2006 = vpack.c.b16 %v1766, %v1758
    %v2007 = vpack.c.b16 %v1767, %v1759
    %v2008 = vpack.c.b16 %v1768, %v1760
    %v2009 = vpack.c.b16 %v1769, %v1761
    %v2010 = vpack.c.b16 %v1770, %v1762
    %v2011 = vpack.c.b16 %v1771, %v1763
    %v2012 = vpack.c.b16 %v1772, %v1764
    %v2013 = vpack.c.b16 %v1781, %v1773
    %v2014 = vpack.c.b16 %v1782, %v1774
    %v2015 = vpack.c.b16 %v1783, %v1775
    %v2016 = vpack.c.b16 %v1784, %v1776
    %v2017 = vpack.c.b16 %v1785, %v1777
    %v2018 = vpack.c.b16 %v1786, %v1778
    %v2019 = vpack.c.b16 %v1787, %v1779
    %v2020 = vpack.c.b16 %v1788, %v1780
    %v2021 = vpack.c.b16 %v1797, %v1789
    %v2022 = vpack.c.b16 %v1798, %v1790
    %v2023 = vpack.c.b16 %v1799, %v1791
    %v2024 = vpack.c.b16 %v1800, %v1792
    %v2025 = vpack.c.b16 %v1801, %v1793
    %v2026 = vpack.c.b16 %v1802, %v1794
    %v2027 = vpack.c.b16 %v1803, %v1795
    %v2028 = vpack.c.b16 %v1804, %v1796
    %v2029 = vpack.c.b16 %v1813, %v1805
    %v2030 = vpack.c.b16 %v1814, %v1806
    %v2031 = vpack.c.b16 %v1815, %v1807
    %v2032 = vpack.c.b16 %v1816, %v1808
    %v2033 = vpack.c.b16 %v1817, %v1809
    %v2034 = vpack.c.b16 %v1818, %v1810
    %v2035 = vpack.c.b16 %v1819, %v1811
    %v2036 = vpack.c.b16 %v1820, %v1812
    %v2037 = vpack.c.b16 %v1829, %v1821
    %v2038 = vpack.c.b16 %v1830, %v1822
    %v2039 = vpack.c.b16 %v1831, %v1823
    %v2040 = vpack.c.b16 %v1832, %v1824
    %v2041 = vpack.c.b16 %v1833, %v1825
    %v2042 = vpack.c.b16 %v1834, %v1826
    %v2043 = vpack.c.b16 %v1835, %v1827
    %v2044 = vpack.c.b16 %v1836, %v1828
    %v2045 = vpack.c.b16 %v1845, %v1837
    %v2046 = vpack.c.b16 %v1846, %v1838
    %v2047 = vpack.c.b16 %v1847, %v1839
    %v2048 = vpack.c.b16 %v1848, %v1840
    %v2049 = vpack.c.b16 %v1849, %v1841
    %v2050 = vpack.c.b16 %v1850, %v1842
    %v2051 = vpack.c.b16 %v1851, %v1843
    %v2052 = vpack.c.b16 %v1852, %v1844
    %v2053 = vpack.c.b16 %v1861, %v1853
    %v2054 = vpack.c.b16 %v1862, %v1854
    %v2055 = vpack.c.b16 %v1863, %v1855
    %v2056 = vpack.c.b16 %v1864, %v1856
    %v2057 = vpack.c.b16 %v1865, %v1857
    %v2058 = vpack.c.b16 %v1866, %v1858
    %v2059 = vpack.c.b16 %v1867, %v1859
    %v2060 = vpack.c.b16 %v1868, %v1860
    %v2061 = vpack.c.b16 %v1877, %v1869
    %v2062 = vpack.c.b16 %v1878, %v1870
    %v2063 = vpack.c.b16 %v1879, %v1871
    %v2064 = vpack.c.b16 %v1880, %v1872
    %v2065 = vpack.c.b16 %v1881, %v1873
    %v2066 = vpack.c.b16 %v1882, %v1874
    %v2067 = vpack.c.b16 %v1883, %v1875
    %v2068 = vpack.c.b16 %v1884, %v1876
    %v2069 = vpack.c.b16 %v1893, %v1885
    %v2070 = vpack.c.b16 %v1894, %v1886
    %v2071 = vpack.c.b16 %v1895, %v1887
    %v2072 = vpack.c.b16 %v1896, %v1888
    %v2073 = vpack.c.b16 %v1897, %v1889
    %v2074 = vpack.c.b16 %v1898, %v1890
    %v2075 = vpack.c.b16 %v1899, %v1891
    %v2076 = vpack.c.b16 %v1900, %v1892
    %v2077 = vpack.c.b16 %v1909, %v1901
    %v2078 = vpack.c.b16 %v1910, %v1902
    %v2079 = vpack.c.b16 %v1911, %v1903
    %v2080 = vpack.c.b16 %v1912, %v1904
    %v2081 = vpack.c.b16 %v1913, %v1905
    %v2082 = vpack.c.b16 %v1914, %v1906
    %v2083 = vpack.c.b16 %v1915, %v1907
    %v2084 = vpack.c.b16 %v1916, %v1908
    %v2085 = vpack.c.b16 %v1925, %v1917
    %v2086 = vpack.c.b16 %v1926, %v1918
    %v2087 = vpack.c.b16 %v1927, %v1919
    %v2088 = vpack.c.b16 %v1928, %v1920
    %v2089 = vpack.c.b16 %v1929, %v1921
    %v2090 = vpack.c.b16 %v1930, %v1922
    %v2091 = vpack.c.b16 %v1931, %v1923
    %v2092 = vpack.c.b16 %v1932, %v1924
    %v2093 = vpack.c.b16 %v1941, %v1933
    %v2094 = vpack.c.b16 %v1942, %v1934
    %v2095 = vpack.c.b16 %v1943, %v1935
    %v2096 = vpack.c.b16 %v1944, %v1936
    %v2097 = vpack.c.b16 %v1945, %v1937
    %v2098 = vpack.c.b16 %v1946, %v1938
    %v2099 = vpack.c.b16 %v1947, %v1939
    %v2100 = vpack.c.b16 %v1948, %v1940
    %v2101 = vpack.c.b16 %v1957, %v1949
    %v2102 = vpack.c.b16 %v1958, %v1950
    %v2103 = vpack.c.b16 %v1959, %v1951
    %v2104 = vpack.c.b16 %v1960, %v1952
    %v2105 = vpack.c.b16 %v1961, %v1953
    %v2106 = vpack.c.b16 %v1962, %v1954
    %v2107 = vpack.c.b16 %v1963, %v1955
    %v2108 = vpack.c.b16 %v1964, %v1956
    %v2109 = vpack.c.b16 %v1973, %v1965
    %v2110 = vpack.c.b16 %v1974, %v1966
    %v2111 = vpack.c.b16 %v1975, %v1967
    %v2112 = vpack.c.b16 %v1976, %v1968
    %v2113 = vpack.c.b16 %v1977, %v1969
    %v2114 = vpack.c.b16 %v1978, %v1970
    %v2115 = vpack.c.b16 %v1979, %v1971
    %v2116 = vpack.c.b16 %v1980, %v1972
    %v2117 = vpack.c.b16 %v1989, %v1981
    %v2118 = vpack.c.b16 %v1990, %v1982
    %v2119 = vpack.c.b16 %v1991, %v1983
    %v2120 = vpack.c.b16 %v1992, %v1984
    %v2121 = vpack.c.b16 %v1993, %v1985
    %v2122 = vpack.c.b16 %v1994, %v1986
    %v2123 = vpack.c.b16 %v1995, %v1987
    %v2124 = vpack.c.b16 %v1996, %v1988
    %2253 = vmatprep.subr.bf16.mxu0 %v2054
    %2254 = vmatpush1.bf16.msra.mxu0 %v2053
    %2255 = vmatprep.subr.bf16.mxu0 %v2046
    %2256 = vmatpush1.bf16.msra.mxu0 %v2045
    %2257 = vmatprep.subr.bf16.mxu0 %v2038
    %2258 = vmatpush1.bf16.msra.mxu0 %v2037
    %2259 = vmatprep.subr.bf16.mxu0 %v2030
    %2260 = vmatpush1.bf16.msra.mxu0 %v2029
    %2261 = vmatprep.subr.bf16.mxu0 %v2022
    %2262 = vmatpush1.bf16.msra.mxu0 %v2021
    %2263 = vmatprep.subr.bf16.mxu0 %v2014
    %2264 = vmatpush1.bf16.msra.mxu0 %v2013
    %2265 = vmatprep.subr.bf16.mxu0 %v2006
    %2266 = vmatpush1.bf16.msra.mxu0 %v2005
    %2267 = vmatprep.subr.bf16.mxu0 %v1998
    %2268 = vmatpush1.bf16.msra.mxu0 %v1997
    %2269 = vmatprep.subr.bf16.mxu0 %v2118
    %2270 = vmatpush2.bf16.msra.mxu0 %v2117
    %2271 = vmatprep.subr.bf16.mxu0 %v2110
    %2272 = vmatpush2.bf16.msra.mxu0 %v2109
    %2273 = vmatprep.subr.bf16.mxu0 %v2102
    %2274 = vmatpush2.bf16.msra.mxu0 %v2101
    %2275 = vmatprep.subr.bf16.mxu0 %v2094
    %2276 = vmatpush2.bf16.msra.mxu0 %v2093
    %2277 = vmatprep.subr.bf16.mxu0 %v2086
    %2278 = vmatpush2.bf16.msra.mxu0 %v2085
    %2279 = vmatprep.subr.bf16.mxu0 %v2078
    %2280 = vmatpush2.bf16.msra.mxu0 %v2077
    %2281 = vmatprep.subr.bf16.mxu0 %v2070
    %2282 = vmatpush2.bf16.msra.mxu0 %v2069
    %2283 = vmatprep.subr.bf16.mxu0 %v2062
    %2284 = vmatpush2.bf16.msra.mxu0 %v2061
    %2285 = vmatprep.mubr.bf16.mxu0 %v1443
    %2286 = vmatmul.mubr.bf16.gmra.mxu0 %v1442
    %v2287 = vpop.f32.mrf.mxu0
    %v2288 = vadd.f32 %v1576, %v2287
    %v2289 = vpop.f32.mrf.mxu0
    %v2290 = vadd.f32 %v1580, %v2289
    %v2291 = vpop.f32.mrf.mxu0
    %v2292 = vpop.f32.mrf.mxu0
    %2293 = vdwg.mxu0
    %2294 = vmatprep.subr.bf16.mxu0 %v2056
    %2295 = vmatpush1.bf16.msra.mxu0 %v2055
    %2296 = vmatprep.subr.bf16.mxu0 %v2048
    %2297 = vmatpush1.bf16.msra.mxu0 %v2047
    %2298 = vmatprep.subr.bf16.mxu0 %v2040
    %2299 = vmatpush1.bf16.msra.mxu0 %v2039
    %2300 = vmatprep.subr.bf16.mxu0 %v2032
    %2301 = vmatpush1.bf16.msra.mxu0 %v2031
    %2302 = vmatprep.subr.bf16.mxu0 %v2024
    %2303 = vmatpush1.bf16.msra.mxu0 %v2023
    %2304 = vmatprep.subr.bf16.mxu0 %v2016
    %2305 = vmatpush1.bf16.msra.mxu0 %v2015
    %2306 = vmatprep.subr.bf16.mxu0 %v2008
    %2307 = vmatpush1.bf16.msra.mxu0 %v2007
    %2308 = vmatprep.subr.bf16.mxu0 %v2000
    %2309 = vmatpush1.bf16.msra.mxu0 %v1999
    %2310 = vmatprep.subr.bf16.mxu0 %v2120
    %2311 = vmatpush2.bf16.msra.mxu0 %v2119
    %2312 = vmatprep.subr.bf16.mxu0 %v2112
    %2313 = vmatpush2.bf16.msra.mxu0 %v2111
    %2314 = vmatprep.subr.bf16.mxu0 %v2104
    %2315 = vmatpush2.bf16.msra.mxu0 %v2103
    %2316 = vmatprep.subr.bf16.mxu0 %v2096
    %2317 = vmatpush2.bf16.msra.mxu0 %v2095
    %2318 = vmatprep.subr.bf16.mxu0 %v2088
    %2319 = vmatpush2.bf16.msra.mxu0 %v2087
    %2320 = vmatprep.subr.bf16.mxu0 %v2080
    %2321 = vmatpush2.bf16.msra.mxu0 %v2079
    %2322 = vmatprep.subr.bf16.mxu0 %v2072
    %2323 = vmatpush2.bf16.msra.mxu0 %v2071
    %2324 = vmatprep.subr.bf16.mxu0 %v2064
    %2325 = vmatpush2.bf16.msra.mxu0 %v2063
    %2326 = vmatprep.mubr.bf16.mxu0 %v1443
    %2327 = vmatmul.mubr.bf16.gmra.mxu0 %v1442
    %v2328 = vpop.f32.mrf.mxu0
    %v2329 = vadd.f32 %v1584, %v2328
    %v2330 = vpop.f32.mrf.mxu0
    %v2331 = vadd.f32 %v1588, %v2330
    %v2332 = vpop.f32.mrf.mxu0
    %v2333 = vpop.f32.mrf.mxu0
    %2334 = vdwg.mxu0
    %2335 = vmatprep.subr.bf16.mxu0 %v2058
    %2336 = vmatpush1.bf16.msra.mxu0 %v2057
    %2337 = vmatprep.subr.bf16.mxu0 %v2050
    %2338 = vmatpush1.bf16.msra.mxu0 %v2049
    %2339 = vmatprep.subr.bf16.mxu0 %v2042
    %2340 = vmatpush1.bf16.msra.mxu0 %v2041
    %2341 = vmatprep.subr.bf16.mxu0 %v2034
    %2342 = vmatpush1.bf16.msra.mxu0 %v2033
    %2343 = vmatprep.subr.bf16.mxu0 %v2026
    %2344 = vmatpush1.bf16.msra.mxu0 %v2025
    %2345 = vmatprep.subr.bf16.mxu0 %v2018
    %2346 = vmatpush1.bf16.msra.mxu0 %v2017
    %2347 = vmatprep.subr.bf16.mxu0 %v2010
    %2348 = vmatpush1.bf16.msra.mxu0 %v2009
    %2349 = vmatprep.subr.bf16.mxu0 %v2002
    %2350 = vmatpush1.bf16.msra.mxu0 %v2001
    %2351 = vmatprep.subr.bf16.mxu0 %v2122
    %2352 = vmatpush2.bf16.msra.mxu0 %v2121
    %2353 = vmatprep.subr.bf16.mxu0 %v2114
    %2354 = vmatpush2.bf16.msra.mxu0 %v2113
    %2355 = vmatprep.subr.bf16.mxu0 %v2106
    %2356 = vmatpush2.bf16.msra.mxu0 %v2105
    %2357 = vmatprep.subr.bf16.mxu0 %v2098
    %2358 = vmatpush2.bf16.msra.mxu0 %v2097
    %2359 = vmatprep.subr.bf16.mxu0 %v2090
    %2360 = vmatpush2.bf16.msra.mxu0 %v2089
    %2361 = vmatprep.subr.bf16.mxu0 %v2082
    %2362 = vmatpush2.bf16.msra.mxu0 %v2081
    %2363 = vmatprep.subr.bf16.mxu0 %v2074
    %2364 = vmatpush2.bf16.msra.mxu0 %v2073
    %2365 = vmatprep.subr.bf16.mxu0 %v2066
    %2366 = vmatpush2.bf16.msra.mxu0 %v2065
    %2367 = vmatprep.mubr.bf16.mxu0 %v1443
    %2368 = vmatmul.mubr.bf16.gmra.mxu0 %v1442
    %v2369 = vpop.f32.mrf.mxu0
    %v2370 = vadd.f32 %v1592, %v2369
    %v2371 = vpop.f32.mrf.mxu0
    %v2372 = vadd.f32 %v1596, %v2371
    %v2373 = vpop.f32.mrf.mxu0
    %v2374 = vpop.f32.mrf.mxu0
    %2375 = vdwg.mxu0
    %2376 = vmatprep.subr.bf16.mxu0 %v2060
    %2377 = vmatpush1.bf16.msra.mxu0 %v2059
    %2378 = vmatprep.subr.bf16.mxu0 %v2052
    %2379 = vmatpush1.bf16.msra.mxu0 %v2051
    %2380 = vmatprep.subr.bf16.mxu0 %v2044
    %2381 = vmatpush1.bf16.msra.mxu0 %v2043
    %2382 = vmatprep.subr.bf16.mxu0 %v2036
    %2383 = vmatpush1.bf16.msra.mxu0 %v2035
    %2384 = vmatprep.subr.bf16.mxu0 %v2028
    %2385 = vmatpush1.bf16.msra.mxu0 %v2027
    %2386 = vmatprep.subr.bf16.mxu0 %v2020
    %2387 = vmatpush1.bf16.msra.mxu0 %v2019
    %2388 = vmatprep.subr.bf16.mxu0 %v2012
    %2389 = vmatpush1.bf16.msra.mxu0 %v2011
    %2390 = vmatprep.subr.bf16.mxu0 %v2004
    %2391 = vmatpush1.bf16.msra.mxu0 %v2003
    %2392 = vmatprep.subr.bf16.mxu0 %v2124
    %2393 = vmatpush2.bf16.msra.mxu0 %v2123
    %2394 = vmatprep.subr.bf16.mxu0 %v2116
    %2395 = vmatpush2.bf16.msra.mxu0 %v2115
    %2396 = vmatprep.subr.bf16.mxu0 %v2108
    %2397 = vmatpush2.bf16.msra.mxu0 %v2107
    %2398 = vmatprep.subr.bf16.mxu0 %v2100
    %2399 = vmatpush2.bf16.msra.mxu0 %v2099
    %2400 = vmatprep.subr.bf16.mxu0 %v2092
    %2401 = vmatpush2.bf16.msra.mxu0 %v2091
    %2402 = vmatprep.subr.bf16.mxu0 %v2084
    %2403 = vmatpush2.bf16.msra.mxu0 %v2083
    %2404 = vmatprep.subr.bf16.mxu0 %v2076
    %2405 = vmatpush2.bf16.msra.mxu0 %v2075
    %2406 = vmatprep.subr.bf16.mxu0 %v2068
    %2407 = vmatpush2.bf16.msra.mxu0 %v2067
    %2408 = vmatprep.mubr.bf16.mxu0 %v1443
    %2409 = vmatmul.mubr.bf16.gmra.mxu0 %v1442
    %v2410 = vpop.f32.mrf.mxu0
    %v2411 = vadd.f32 %v1600, %v2410
    %v2412 = vpop.f32.mrf.mxu0
    %v2413 = vadd.f32 %v1604, %v2412
    %v2414 = vpop.f32.mrf.mxu0
    %v2415 = vpop.f32.mrf.mxu0
    %2416 = vdwg.mxu0
    %v2425 = vcombine.low %v2288, %v2290
    %v2426 = vcombine.low %v2329, %v2331
    %v2427 = vcombine.low %v2370, %v2372
    %v2428 = vcombine.low %v2411, %v2413
    %2433 = vst [vmem:[%s8] sm:$0xff] %v2425
    %2434 = vst [vmem:[%s8 + $0x8] sm:$0xff] %v2426
    %2435 = vst [vmem:[%s8 + $0x10] sm:$0xff] %v2427
    %2436 = vst [vmem:[%s8 + $0x18] sm:$0xff] %v2428
    // Predicated region
    $region38: #{lssl_net_forward.1} parent=1 // pred_check
      _
    $region39: #{lssl_net_forward.1} parent=1 // pred_check_branch
      %2438 = sbr.rel (0) target = $region41
    $region40: #{lssl_net_forward.1} parent=1 // pred_region
      _
    $region41: #{lssl_net_forward.1} parent=1 // pred_fallthru
      _
    // Predicated region
    $region42: #{lssl_net_forward.1} parent=1 // pred_check
      _
    $region43: #{lssl_net_forward.1} parent=1 // pred_check_branch
      %2440 = sbr.rel (0) target = $region45
    $region44: #{lssl_net_forward.1} parent=1 // pred_region
      _
    $region45: #{lssl_net_forward.1} parent=1 // pred_fallthru
      _
    // Predicated region
    $region46: #{lssl_net_forward.1} parent=1 // pred_check
      _
    $region47: #{lssl_net_forward.1} parent=1 // pred_check_branch
      %2442 = sbr.rel (0) target = $region49
    $region48: #{lssl_net_forward.1} parent=1 // pred_region
      _
    $region49: #{lssl_net_forward.1} parent=1 // pred_fallthru
      _
    // Predicated region
    $region50: #{lssl_net_forward.1} parent=1 // pred_check
      _
    $region51: #{lssl_net_forward.1} parent=1 // pred_check_branch
      %2444 = sbr.rel (0) target = $region53
    $region52: #{lssl_net_forward.1} parent=1 // pred_region
      _
    $region53: #{lssl_net_forward.1} parent=1 // pred_fallthru
      _
    %2445 = vsyncpa [#allocation4], 1
    %2446 = vsyncpa [#allocation6], 1

</llo_original>
